<compile_context>
chip_gen: v6e
topology: v6e:2x2x1
jax: 0.10.0
libtpu: 0.0.40
codegen_flags: <defaults>
</compile_context>

<pallas_src>
import math
from functools import partial

import jax
import jax.numpy as jnp
from jax import lax
from jax.experimental import pallas as pl
from jax.experimental.pallas import tpu as pltpu

LN_EPS = 1e-6  # torchvision ViT uses LayerNorm(eps=1e-6)


def _round_up(x, m):
    return (x + m - 1) // m * m


# ----------------------- fused patch-embed + encoder kernel -----------------------

def _encoder_kernel(p_ref, cw_ref, add_ref,
                    g1_ref, b1_ref, qkvw_ref, qkvb_ref, ow_ref, ob_ref,
                    g2_ref, b2_ref, w1_ref, bb1_ref, w2_ref, bb2_ref,
                    o_ref, *, heads, head_dim, head_pad, s_real, eps):
    l = pl.program_id(1)

    # ---- layer-0 prologue: patch embedding + CLS/pos embedding fused in ----
    # Row 0 and rows >= s_real of p_ref are zero, so the matmul contributes
    # nothing there; add_ref already holds [cls+pos0 | conv_b+pos1.. | 0].
    @pl.when(l == 0)
    def _():
        o_ref[0] = (jnp.dot(p_ref[0].astype(jnp.bfloat16), cw_ref[...],
                            preferred_element_type=jnp.float32) + add_ref[...])

    x = o_ref[0]                                     # (Spad, D) f32, VMEM-resident
    S, D = x.shape

    # ---- attention block: x = x + proj(MHA(LN1(x))) ----
    mean = jnp.mean(x, axis=-1, keepdims=True)
    var = jnp.mean(jnp.square(x - mean), axis=-1, keepdims=True)
    xn = ((x - mean) * lax.rsqrt(var + eps) * g1_ref[0] + b1_ref[0]).astype(jnp.bfloat16)

    # fused QKV projection; columns are packed per head as [q|k|v], each padded
    # to 128 lanes so every slice below starts at a multiple of 128.
    qkv = jnp.dot(xn, qkvw_ref[0],
                  preferred_element_type=jnp.float32) + qkvb_ref[0]   # (S, heads*3*head_pad)

    col = lax.broadcasted_iota(jnp.int32, (S, S), 1)
    key_mask = col < s_real                          # mask padded key columns
    scale = 1.0 / math.sqrt(head_dim)                # scale by the REAL head dim

    attn = jnp.zeros((S, D), jnp.float32)
    for h in range(heads):
        base = h * 3 * head_pad                      # 128-lane-aligned offsets
        q = qkv[:, base:base + head_pad].astype(jnp.bfloat16)
        k = qkv[:, base + head_pad:base + 2 * head_pad].astype(jnp.bfloat16)
        v = qkv[:, base + 2 * head_pad:base + 3 * head_pad].astype(jnp.bfloat16)
        s = lax.dot_general(q, k, (((1,), (1,)), ((), ())),
                            preferred_element_type=jnp.float32) * scale   # (S, S)
        s = jnp.where(key_mask, s, jnp.float32(-1e30))
        s = s - jnp.max(s, axis=-1, keepdims=True)
        pr = jnp.exp(s)
        pr = pr * pl.reciprocal(jnp.sum(pr, axis=-1, keepdims=True), approx=True)
        ah = jnp.dot(pr.astype(jnp.bfloat16), v,
                     preferred_element_type=jnp.float32)                  # (S, head_pad)
        # head-concat folded into out-projection: sum of per-head partials
        attn = attn + jnp.dot(ah.astype(jnp.bfloat16),
                              ow_ref[0, h * head_pad:(h + 1) * head_pad, :],
                              preferred_element_type=jnp.float32)
    x = x + attn + ob_ref[0]                         # residual add fused

    # ---- MLP block: x = x + W2 @ GELU(W1 @ LN2(x)) ----
    mean = jnp.mean(x, axis=-1, keepdims=True)
    var = jnp.mean(jnp.square(x - mean), axis=-1, keepdims=True)
    xn = ((x - mean) * lax.rsqrt(var + eps) * g2_ref[0] + b2_ref[0]).astype(jnp.bfloat16)
    hmid = jnp.dot(xn, w1_ref[0], preferred_element_type=jnp.float32) + bb1_ref[0]
    hmid = 0.5 * hmid * (1.0 + lax.erf(hmid * (1.0 / math.sqrt(2.0))))  # exact-erf GELU
    y = jnp.dot(hmid.astype(jnp.bfloat16), w2_ref[0],
                preferred_element_type=jnp.float32) + bb2_ref[0]

    o_ref[0] = x + y                                 # residual add fused


def encoder_forward(patches_pad, params, cfg):
    """One pallas_call for patch-embed + all encoder layers. patches_pad: (B,Spad,Cpp) f32."""
    B, Spad, Cpp = patches_pad.shape
    D, heads = cfg["hidden"], cfg["heads"]
    head_dim = D // heads
    L = params["qkv_w"].shape[0]
    QW = params["qkv_w"].shape[2]
    head_pad = params["out_w"].shape[1] // heads
    mlp_dim = params["mlp_w1"].shape[2]
    s_real = (cfg["image"] // cfg["patch"]) ** 2 + 1

    act = lambda b, l: (b, 0, 0)     # per-batch activation block
    lay = lambda b, l: (l, 0, 0)     # per-layer stacked weight block
    glob = lambda b, l: (0, 0)       # whole (small) global 2-D array

    return pl.pallas_call(
        partial(_encoder_kernel, heads=heads, head_dim=head_dim,
                head_pad=head_pad, s_real=s_real, eps=LN_EPS),
        out_shape=jax.ShapeDtypeStruct((B, Spad, D), jnp.float32),
        grid=(B, L),
        in_specs=[
            pl.BlockSpec((1, Spad, Cpp), act),                  # padded patches
            pl.BlockSpec((Cpp, D), glob),                       # conv_w (norm folded)
            pl.BlockSpec((Spad, D), glob),                      # cls+pos+bias additive map
            pl.BlockSpec((1, 1, D), lay), pl.BlockSpec((1, 1, D), lay),          # ln1
            pl.BlockSpec((1, D, QW), lay), pl.BlockSpec((1, 1, QW), lay),        # qkv
            pl.BlockSpec((1, heads * head_pad, D), lay), pl.BlockSpec((1, 1, D), lay),  # out proj
            pl.BlockSpec((1, 1, D), lay), pl.BlockSpec((1, 1, D), lay),          # ln2
            pl.BlockSpec((1, D, mlp_dim), lay), pl.BlockSpec((1, 1, mlp_dim), lay),     # mlp1
            pl.BlockSpec((1, mlp_dim, D), lay), pl.BlockSpec((1, 1, D), lay),    # mlp2
        ],
        out_specs=pl.BlockSpec((1, Spad, D), act),
        compiler_params=pltpu.CompilerParams(
            dimension_semantics=("parallel", "arbitrary")),
    )(patches_pad, params["conv_w"], params["embed_add"],
      params["ln1_g"], params["ln1_b"], params["qkv_w"], params["qkv_b"],
      params["out_w"], params["out_b"], params["ln2_g"], params["ln2_b"],
      params["mlp_w1"], params["mlp_b1"], params["mlp_w2"], params["mlp_b2"])


# ----------------------------- fused final LN + fc head -----------------------------

def _head_kernel(x_ref, g_ref, b_ref, w_ref, fb_ref, o_ref, *, eps):
    cls = x_ref[...][:, 0, :]                        # (B, D) CLS rows, sliced in-kernel
    mean = jnp.mean(cls, axis=-1, keepdims=True)
    var = jnp.mean(jnp.square(cls - mean), axis=-1, keepdims=True)
    xn = (cls - mean) * lax.rsqrt(var + eps) * g_ref[...] + b_ref[...]
    o_ref[...] = (jnp.dot(xn.astype(jnp.bfloat16), w_ref[...],
                          preferred_element_type=jnp.float32)
                  + fb_ref[...]).astype(o_ref.dtype)


def head_fc(xt, params):
    B = xt.shape[0]
    Cpad = params["fc_w"].shape[1]
    return pl.pallas_call(
        partial(_head_kernel, eps=LN_EPS),
        out_shape=jax.ShapeDtypeStruct((B, Cpad), jnp.float32),
    )(xt, params["ln_g"], params["ln_b"], params["fc_w"], params["fc_b"])


def _final_ln_kernel(x_ref, g_ref, b_ref, o_ref, *, eps):
    cls = x_ref[...][:, 0, :]
    mean = jnp.mean(cls, axis=-1, keepdims=True)
    var = jnp.mean(jnp.square(cls - mean), axis=-1, keepdims=True)
    o_ref[...] = ((cls - mean) * lax.rsqrt(var + eps) * g_ref[...]
                  + b_ref[...]).astype(o_ref.dtype)


def final_ln_cls(xt, params):
    B, _, D = xt.shape
    return pl.pallas_call(
        partial(_final_ln_kernel, eps=LN_EPS),
        out_shape=jax.ShapeDtypeStruct((B, D), jnp.float32),
    )(xt, params["ln_g"], params["ln_b"])


# --------------------------- model config / params ---------------------------

# Small synthetic ViT-B/32 analogue (real: img 224, patch 32, D 768, 12 heads,
# 12 layers, mlp 3072, classes 499). D chosen as 128 (lane-dense), head_dim 64.
CFG = dict(image=32, patch=8, channels=3, hidden=128, heads=2, mlp=256,
           layers=2, classes=10)


def init_params(key, cfg):
    C, p, D = cfg["channels"], cfg["patch"], cfg["hidden"]
    heads, mlp_dim, L = cfg["heads"], cfg["mlp"], cfg["layers"]
    head_dim = D // heads
    head_pad = max(128, _round_up(head_dim, 128))        # 128-lane-aligned per-head blocks
    nP = (cfg["image"] // p) ** 2
    S = nP + 1
    Spad = _round_up(S, 8)                               # sublane-aligned sequence
    Cpp = C * p * p
    classes = cfg["classes"]
    Cpad = _round_up(classes, 128)

    def nrm(k, shape, std=0.02):
        return std * jax.random.normal(k, shape, jnp.float32)

    keys = iter(jax.random.split(key, 3 + 4 * L))

    # conv_proj (kernel=stride=patch) as a [C*p*p, D] matrix, row order (c, ph, pw),
    # with the ImageNet channel normalization of weights.transforms() folded in:
    #   conv((x - mean) * inv_std) = x @ (inv_std * W) + (b - sum mean*inv_std*W)
    mean = jnp.array([0.485, 0.456, 0.406], jnp.float32)
    std = jnp.array([0.229, 0.224, 0.225], jnp.float32)
    conv_w = nrm(next(keys), (Cpp, D))
    conv_b = jnp.zeros((D,), jnp.float32)
    inv_std_rows = jnp.repeat(1.0 / std, p * p)
    mean_rows = jnp.repeat(mean, p * p)
    w_folded = conv_w * inv_std_rows[:, None]
    b_folded = conv_b - jnp.sum(w_folded * mean_rows[:, None], axis=0)

    # class token + positional embedding + conv bias folded into one additive
    # map over the padded token rows: [cls+pos0 | conv_b+pos1..nP | zeros]
    pos = nrm(next(keys), (S, D))
    class_token = jnp.zeros((D,), jnp.float32)
    embed_add = jnp.zeros((Spad, D), jnp.float32)
    embed_add = embed_add.at[0].set(class_token + pos[0])
    embed_add = embed_add.at[1:1 + nP].set(b_folded[None, :] + pos[1:])

    # fc head (Linear(768, 499) analogue), columns zero-padded to 128 lanes
    fc_w = nrm(next(keys), (D, classes))
    fc_w_pad = jnp.zeros((D, Cpad), jnp.float32).at[:, :classes].set(fc_w)
    fc_b_pad = jnp.zeros((1, Cpad), jnp.float32)

    names = ("ln1_g", "ln1_b", "qkv_w", "qkv_b", "out_w", "out_b",
             "ln2_g", "ln2_b", "mlp_w1", "mlp_b1", "mlp_w2", "mlp_b2")
    per_layer = {n: [] for n in names}
    for _ in range(L):
        qkv_w = nrm(next(keys), (D, 3 * D))      # logical columns [q | k | v]
        qkv_b = jnp.zeros((1, 3 * D), jnp.float32)
        out_w = nrm(next(keys), (D, D))          # rows in head-concat order
        mlp_w1 = nrm(next(keys), (D, mlp_dim))
        mlp_w2 = nrm(next(keys), (mlp_dim, D))

        # pack into 128-lane-aligned per-head layout:
        #   head h -> columns [h*3*head_pad + {0,1,2}*head_pad : +head_dim], rest zero
        qkv_w_p = jnp.zeros((D, heads * 3 * head_pad), jnp.float32)
        qkv_b_p = jnp.zeros((1, heads * 3 * head_pad), jnp.float32)
        out_w_p = jnp.zeros((heads * head_pad, D), jnp.float32)
        for h in range(heads):
            for c in range(3):                   # q, k, v
                dst = (h * 3 + c) * head_pad
                src = c * D + h * head_dim
                qkv_w_p = qkv_w_p.at[:, dst:dst + head_dim].set(
                    qkv_w[:, src:src + head_dim])
                qkv_b_p = qkv_b_p.at[:, dst:dst + head_dim].set(
                    qkv_b[:, src:src + head_dim])
            out_w_p = out_w_p.at[h * head_pad:h * head_pad + head_dim].set(
                out_w[h * head_dim:(h + 1) * head_dim])

        per_layer["ln1_g"].append(jnp.ones((1, D), jnp.float32))
        per_layer["ln1_b"].append(jnp.zeros((1, D), jnp.float32))
        per_layer["qkv_w"].append(qkv_w_p.astype(jnp.bfloat16))
        per_layer["qkv_b"].append(qkv_b_p)
        per_layer["out_w"].append(out_w_p.astype(jnp.bfloat16))
        per_layer["out_b"].append(jnp.zeros((1, D), jnp.float32))
        per_layer["ln2_g"].append(jnp.ones((1, D), jnp.float32))
        per_layer["ln2_b"].append(jnp.zeros((1, D), jnp.float32))
        per_layer["mlp_w1"].append(mlp_w1.astype(jnp.bfloat16))
        per_layer["mlp_b1"].append(jnp.zeros((1, mlp_dim), jnp.float32))
        per_layer["mlp_w2"].append(mlp_w2.astype(jnp.bfloat16))
        per_layer["mlp_b2"].append(jnp.zeros((1, D), jnp.float32))

    params = {
        "conv_w": w_folded.astype(jnp.bfloat16),
        "embed_add": embed_add,
        "ln_g": jnp.ones((1, D), jnp.float32),
        "ln_b": jnp.zeros((1, D), jnp.float32),
        "fc_w": fc_w_pad.astype(jnp.bfloat16),
        "fc_b": fc_b_pad,
    }
    for n in names:                               # stacked (L, ...) weights
        params[n] = jnp.stack(per_layer[n])
    return params


# ------------------------------- forward pass -------------------------------

def font_classifier_forward(params, x, cfg, use_fc=True):
    B, C, H, W = x.shape
    p = cfg["patch"]
    nH, nW = H // p, W // p
    nP = nH * nW
    Cpp = C * p * p
    Spad = params["embed_add"].shape[0]

    # --- self.preprocess(x): channel normalization folded into conv_w / embed_add ---
    # TODO(synk): the bilinear resize(256) + center-crop(224) of weights.transforms()
    # is not implemented; inputs are assumed to already be at model resolution.

    # --- Conv2d(kernel=stride=patch) == patchify; rows padded so the encoder kernel's
    #     single matmul + additive map writes [CLS | tokens | pad] directly (one small
    #     XLA fusion, no concatenate / broadcast of the activation tensor) ---
    patches = x.reshape(B, C, nH, p, nW, p).transpose(0, 2, 4, 1, 3, 5).reshape(B, nP, Cpp)
    patches_pad = jnp.zeros((B, Spad, Cpp), jnp.float32).at[:, 1:1 + nP].set(patches)

    # --- patch-embed + all encoder layers in ONE fused kernel ---
    xt = encoder_forward(patches_pad, params, cfg)        # (B, Spad, D) f32

    # --- final encoder LayerNorm on CLS only (LN is per-token) + fc head ---
    if use_fc:
        logits = head_fc(xt, params)                      # (B, Cpad)
        return logits[:, :cfg["classes"]]
    return final_ln_cls(xt, params)                       # (B, D)


# ----------------------------------- main -----------------------------------

if __name__ == "__main__":
    key = jax.random.PRNGKey(0)
    pkey, xkey = jax.random.split(key)
    params = init_params(pkey, CFG)
    # NCHW float image in [0, 1]
    x = jax.random.uniform(
        xkey, (2, CFG["channels"], CFG["image"], CFG["image"]), jnp.float32)

    fwd = jax.jit(partial(font_classifier_forward, cfg=CFG, use_fc=True))
    out = fwd(params, x)
    jax.block_until_ready(out)
    assert out.shape == (2, CFG["classes"]) and out.dtype == jnp.float32
    print("KERNEL_OK")
</pallas_src>

<mosaic_0001>
module attributes {stable_mosaic.version = 11 : i64} {
  func.func @_head_kernel(%arg0: memref<2x24x128xf32, #tpu.memory_space<vmem>>, %arg1: memref<1x128xf32, #tpu.memory_space<vmem>>, %arg2: memref<1x128xf32, #tpu.memory_space<vmem>>, %arg3: memref<128x128xbf16, #tpu.memory_space<vmem>>, %arg4: memref<1x128xf32, #tpu.memory_space<vmem>>, %arg5: memref<2x128xf32, #tpu.memory_space<vmem>>) attributes {dimension_semantics = [], scalar_prefetch = 0 : i64, scratch_operands = 0 : i64, tpu.core_type = #tpu.core_type<tc>} {
    %c0 = arith.constant 0 : index
    %c0_0 = arith.constant 0 : index
    %c0_1 = arith.constant 0 : index
    %0 = vector.load %arg0[%c0, %c0_0, %c0_1] : memref<2x24x128xf32, #tpu.memory_space<vmem>>, vector<2x24x128xf32>
    %1 = vector.extract_strided_slice %0 {offsets = [0, 0, 0], sizes = [2, 1, 128], strides = [1, 1, 1]} : vector<2x24x128xf32> to vector<2x1x128xf32>
    %2 = vector.shape_cast %1 : vector<2x1x128xf32> to vector<2x128xf32>
    %cst = arith.constant dense<0.000000e+00> : vector<2xf32>
    %3 = vector.multi_reduction <add>, %2, %cst [1] : vector<2x128xf32> to vector<2xf32>
    %4 = vector.shape_cast %3 : vector<2xf32> to vector<2x1xf32>
    %cst_2 = arith.constant 1.280000e+02 : f32
    %5 = vector.broadcast %cst_2 : f32 to vector<2x1xf32>
    %6 = arith.divf %4, %5 : vector<2x1xf32>
    %7 = vector.broadcast %6 : vector<2x1xf32> to vector<2x128xf32>
    %8 = arith.subf %2, %7 : vector<2x128xf32>
    %9 = arith.mulf %8, %8 : vector<2x128xf32>
    %cst_3 = arith.constant dense<0.000000e+00> : vector<2xf32>
    %10 = vector.multi_reduction <add>, %9, %cst_3 [1] : vector<2x128xf32> to vector<2xf32>
    %11 = vector.shape_cast %10 : vector<2xf32> to vector<2x1xf32>
    %cst_4 = arith.constant 1.280000e+02 : f32
    %12 = vector.broadcast %cst_4 : f32 to vector<2x1xf32>
    %13 = arith.divf %11, %12 : vector<2x1xf32>
    %14 = vector.broadcast %6 : vector<2x1xf32> to vector<2x128xf32>
    %15 = arith.subf %2, %14 : vector<2x128xf32>
    %cst_5 = arith.constant 9.99999997E-7 : f32
    %16 = vector.broadcast %cst_5 : f32 to vector<2x1xf32>
    %17 = arith.addf %13, %16 : vector<2x1xf32>
    %18 = math.rsqrt %17 : vector<2x1xf32>
    %19 = vector.broadcast %18 : vector<2x1xf32> to vector<2x128xf32>
    %20 = arith.mulf %15, %19 : vector<2x128xf32>
    %c0_6 = arith.constant 0 : index
    %c0_7 = arith.constant 0 : index
    %21 = vector.load %arg1[%c0_6, %c0_7] : memref<1x128xf32, #tpu.memory_space<vmem>>, vector<1x128xf32>
    %22 = vector.broadcast %21 : vector<1x128xf32> to vector<2x128xf32>
    %23 = arith.mulf %20, %22 : vector<2x128xf32>
    %c0_8 = arith.constant 0 : index
    %c0_9 = arith.constant 0 : index
    %24 = vector.load %arg2[%c0_8, %c0_9] : memref<1x128xf32, #tpu.memory_space<vmem>>, vector<1x128xf32>
    %25 = vector.broadcast %24 : vector<1x128xf32> to vector<2x128xf32>
    %26 = arith.addf %23, %25 : vector<2x128xf32>
    %27 = arith.truncf %26 : vector<2x128xf32> to vector<2x128xbf16>
    %c0_10 = arith.constant 0 : index
    %c0_11 = arith.constant 0 : index
    %28 = vector.load %arg3[%c0_10, %c0_11] : memref<128x128xbf16, #tpu.memory_space<vmem>>, vector<128x128xbf16>
    %cst_12 = arith.constant dense<0.000000e+00> : vector<2x128xf32>
    %29 = tpu.matmul %27, %28, %cst_12 {dimension_numbers = #tpu.dot_dimension_numbers<[1], [0], [0], [1], [0, 0, 1, 1], [], []>} : vector<2x128xbf16>, vector<128x128xbf16>, vector<2x128xf32> -> vector<2x128xf32>
    %c0_13 = arith.constant 0 : index
    %c0_14 = arith.constant 0 : index
    %30 = vector.load %arg4[%c0_13, %c0_14] : memref<1x128xf32, #tpu.memory_space<vmem>>, vector<1x128xf32>
    %31 = vector.broadcast %30 : vector<1x128xf32> to vector<2x128xf32>
    %32 = arith.addf %29, %31 : vector<2x128xf32>
    %c0_15 = arith.constant 0 : index
    %c0_16 = arith.constant 0 : index
    %33 = vector.load %arg5[%c0_15, %c0_16] : memref<2x128xf32, #tpu.memory_space<vmem>>, vector<2x128xf32>
    tpu.vector_store %arg5[%c0_15, %c0_16], %32 {strides = array<i32>} : memref<2x128xf32, #tpu.memory_space<vmem>>, vector<2x128xf32>,
    return
  }
}

module attributes {stable_mosaic.version = 11 : i64} {
  func.func @_encoder_kernel(%arg0: i32, %arg1: i32, %arg2: memref<1x24x192xf32, #tpu.memory_space<vmem>>, %arg3: memref<192x128xbf16, #tpu.memory_space<vmem>>, %arg4: memref<24x128xf32, #tpu.memory_space<vmem>>, %arg5: memref<1x1x128xf32, #tpu.memory_space<vmem>>, %arg6: memref<1x1x128xf32, #tpu.memory_space<vmem>>, %arg7: memref<1x128x768xbf16, #tpu.memory_space<vmem>>, %arg8: memref<1x1x768xf32, #tpu.memory_space<vmem>>, %arg9: memref<1x256x128xbf16, #tpu.memory_space<vmem>>, %arg10: memref<1x1x128xf32, #tpu.memory_space<vmem>>, %arg11: memref<1x1x128xf32, #tpu.memory_space<vmem>>, %arg12: memref<1x1x128xf32, #tpu.memory_space<vmem>>, %arg13: memref<1x128x256xbf16, #tpu.memory_space<vmem>>, %arg14: memref<1x1x256xf32, #tpu.memory_space<vmem>>, %arg15: memref<1x256x128xbf16, #tpu.memory_space<vmem>>, %arg16: memref<1x1x128xf32, #tpu.memory_space<vmem>>, %arg17: memref<1x24x128xf32, #tpu.memory_space<vmem>>) attributes {dimension_semantics = [#tpu.dimension_semantics<parallel>, #tpu.dimension_semantics<arbitrary>], iteration_bounds = array<i64: 2, 2>, scalar_prefetch = 0 : i64, scratch_operands = 0 : i64, tpu.core_type = #tpu.core_type<tc>, window_params = [{transform_indices = @transform_0, window_bounds = array<i64: 1, 24, 192>}, {pipeline_mode = #tpu.pipeline_mode<synchronous>, transform_indices = @transform_1, window_bounds = array<i64: 192, 128>}, {pipeline_mode = #tpu.pipeline_mode<synchronous>, transform_indices = @transform_2, window_bounds = array<i64: 24, 128>}, {transform_indices = @transform_3, window_bounds = array<i64: 1, 1, 128>}, {transform_indices = @transform_4, window_bounds = array<i64: 1, 1, 128>}, {transform_indices = @transform_5, window_bounds = array<i64: 1, 128, 768>}, {transform_indices = @transform_6, window_bounds = array<i64: 1, 1, 768>}, {transform_indices = @transform_7, window_bounds = array<i64: 1, 256, 128>}, {transform_indices = @transform_8, window_bounds = array<i64: 1, 1, 128>}, {transform_indices = @transform_9, window_bounds = array<i64: 1, 1, 128>}, {transform_indices = @transform_10, window_bounds = array<i64: 1, 1, 128>}, {transform_indices = @transform_11, window_bounds = array<i64: 1, 128, 256>}, {transform_indices = @transform_12, window_bounds = array<i64: 1, 1, 256>}, {transform_indices = @transform_13, window_bounds = array<i64: 1, 256, 128>}, {transform_indices = @transform_14, window_bounds = array<i64: 1, 1, 128>}, {transform_indices = @transform_15, window_bounds = array<i64: 1, 24, 128>}]} {
    %c0_i32 = arith.constant 0 : i32
    %0 = arith.cmpi eq, %arg1, %c0_i32 : i32
    %1 = arith.extui %0 : i1 to i32
    %c0_i32_0 = arith.constant 0 : i32
    %2 = arith.cmpi ne, %1, %c0_i32_0 : i32
    scf.if %2 {
      %c0_74 = arith.constant 0 : index
      %c0_75 = arith.constant 0 : index
      %c0_76 = arith.constant 0 : index
      %158 = vector.load %arg2[%c0_74, %c0_75, %c0_76] : memref<1x24x192xf32, #tpu.memory_space<vmem>>, vector<1x24x192xf32>
      %159 = vector.shape_cast %158 : vector<1x24x192xf32> to vector<24x192xf32>
      %160 = arith.truncf %159 : vector<24x192xf32> to vector<24x192xbf16>
      %c0_77 = arith.constant 0 : index
      %c0_78 = arith.constant 0 : index
      %161 = vector.load %arg3[%c0_77, %c0_78] : memref<192x128xbf16, #tpu.memory_space<vmem>>, vector<192x128xbf16>
      %cst_79 = arith.constant dense<0.000000e+00> : vector<24x128xf32>
      %162 = tpu.matmul %160, %161, %cst_79 {dimension_numbers = #tpu.dot_dimension_numbers<[1], [0], [0], [1], [0, 0, 1, 1], [], []>} : vector<24x192xbf16>, vector<192x128xbf16>, vector<24x128xf32> -> vector<24x128xf32>
      %c0_80 = arith.constant 0 : index
      %c0_81 = arith.constant 0 : index
      %163 = vector.load %arg4[%c0_80, %c0_81] : memref<24x128xf32, #tpu.memory_space<vmem>>, vector<24x128xf32>
      %164 = arith.addf %162, %163 : vector<24x128xf32>
      %c0_82 = arith.constant 0 : index
      %c0_83 = arith.constant 0 : index
      %c0_84 = arith.constant 0 : index
      %165 = vector.load %arg17[%c0_82, %c0_83, %c0_84] : memref<1x24x128xf32, #tpu.memory_space<vmem>>, vector<1x24x128xf32>
      %166 = vector.shape_cast %165 : vector<1x24x128xf32> to vector<24x128xf32>
      %167 = vector.shape_cast %164 : vector<24x128xf32> to vector<1x24x128xf32>
      tpu.vector_store %arg17[%c0_82, %c0_83, %c0_84], %167 {strides = array<i32>} : memref<1x24x128xf32, #tpu.memory_space<vmem>>, vector<1x24x128xf32>,
    } else {
    }
    %c0 = arith.constant 0 : index
    %c0_1 = arith.constant 0 : index
    %c0_2 = arith.constant 0 : index
    %3 = vector.load %arg17[%c0, %c0_1, %c0_2] : memref<1x24x128xf32, #tpu.memory_space<vmem>>, vector<1x24x128xf32>
    %4 = vector.shape_cast %3 : vector<1x24x128xf32> to vector<24x128xf32>
    %cst = arith.constant dense<0.000000e+00> : vector<24xf32>
    %5 = vector.multi_reduction <add>, %4, %cst [1] : vector<24x128xf32> to vector<24xf32>
    %6 = vector.shape_cast %5 : vector<24xf32> to vector<24x1xf32>
    %cst_3 = arith.constant 1.280000e+02 : f32
    %7 = vector.broadcast %cst_3 : f32 to vector<24x1xf32>
    %8 = arith.divf %6, %7 : vector<24x1xf32>
    %9 = vector.broadcast %8 : vector<24x1xf32> to vector<24x128xf32>
    %10 = arith.subf %4, %9 : vector<24x128xf32>
    %11 = arith.mulf %10, %10 : vector<24x128xf32>
    %cst_4 = arith.constant dense<0.000000e+00> : vector<24xf32>
    %12 = vector.multi_reduction <add>, %11, %cst_4 [1] : vector<24x128xf32> to vector<24xf32>
    %13 = vector.shape_cast %12 : vector<24xf32> to vector<24x1xf32>
    %cst_5 = arith.constant 1.280000e+02 : f32
    %14 = vector.broadcast %cst_5 : f32 to vector<24x1xf32>
    %15 = arith.divf %13, %14 : vector<24x1xf32>
    %16 = vector.broadcast %8 : vector<24x1xf32> to vector<24x128xf32>
    %17 = arith.subf %4, %16 : vector<24x128xf32>
    %cst_6 = arith.constant 9.99999997E-7 : f32
    %18 = vector.broadcast %cst_6 : f32 to vector<24x1xf32>
    %19 = arith.addf %15, %18 : vector<24x1xf32>
    %20 = math.rsqrt %19 : vector<24x1xf32>
    %21 = vector.broadcast %20 : vector<24x1xf32> to vector<24x128xf32>
    %22 = arith.mulf %17, %21 : vector<24x128xf32>
    %c0_7 = arith.constant 0 : index
    %c0_8 = arith.constant 0 : index
    %c0_9 = arith.constant 0 : index
    %23 = vector.load %arg5[%c0_7, %c0_8, %c0_9] : memref<1x1x128xf32, #tpu.memory_space<vmem>>, vector<1x1x128xf32>
    %24 = vector.shape_cast %23 : vector<1x1x128xf32> to vector<1x128xf32>
    %25 = vector.broadcast %24 : vector<1x128xf32> to vector<24x128xf32>
    %26 = arith.mulf %22, %25 : vector<24x128xf32>
    %c0_10 = arith.constant 0 : index
    %c0_11 = arith.constant 0 : index
    %c0_12 = arith.constant 0 : index
    %27 = vector.load %arg6[%c0_10, %c0_11, %c0_12] : memref<1x1x128xf32, #tpu.memory_space<vmem>>, vector<1x1x128xf32>
    %28 = vector.shape_cast %27 : vector<1x1x128xf32> to vector<1x128xf32>
    %29 = vector.broadcast %28 : vector<1x128xf32> to vector<24x128xf32>
    %30 = arith.addf %26, %29 : vector<24x128xf32>
    %31 = arith.truncf %30 : vector<24x128xf32> to vector<24x128xbf16>
    %c0_13 = arith.constant 0 : index
    %c0_14 = arith.constant 0 : index
    %c0_15 = arith.constant 0 : index
    %32 = vector.load %arg7[%c0_13, %c0_14, %c0_15] : memref<1x128x768xbf16, #tpu.memory_space<vmem>>, vector<1x128x768xbf16>
    %33 = vector.shape_cast %32 : vector<1x128x768xbf16> to vector<128x768xbf16>
    %cst_16 = arith.constant dense<0.000000e+00> : vector<24x768xf32>
    %34 = tpu.matmul %31, %33, %cst_16 {dimension_numbers = #tpu.dot_dimension_numbers<[1], [0], [0], [1], [0, 0, 1, 1], [], []>} : vector<24x128xbf16>, vector<128x768xbf16>, vector<24x768xf32> -> vector<24x768xf32>
    %c0_17 = arith.constant 0 : index
    %c0_18 = arith.constant 0 : index
    %c0_19 = arith.constant 0 : index
    %35 = vector.load %arg8[%c0_17, %c0_18, %c0_19] : memref<1x1x768xf32, #tpu.memory_space<vmem>>, vector<1x1x768xf32>
    %36 = vector.shape_cast %35 : vector<1x1x768xf32> to vector<1x768xf32>
    %37 = vector.broadcast %36 : vector<1x768xf32> to vector<24x768xf32>
    %38 = arith.addf %34, %37 : vector<24x768xf32>
    %39 = tpu.iota {dimensions = array<i32: 1>} : vector<24x24xi32>
    %c17_i32 = arith.constant 17 : i32
    %40 = vector.broadcast %c17_i32 : i32 to vector<24x24xi32>
    %41 = arith.cmpi slt, %39, %40 : vector<24x24xi32>
    %cst_20 = arith.constant 0.000000e+00 : f32
    %42 = vector.broadcast %cst_20 : f32 to vector<24x128xf32>
    %43 = vector.extract_strided_slice %38 {offsets = [0, 0], sizes = [24, 128], strides = [1, 1]} : vector<24x768xf32> to vector<24x128xf32>
    %44 = arith.truncf %43 : vector<24x128xf32> to vector<24x128xbf16>
    %45 = vector.extract_strided_slice %38 {offsets = [0, 128], sizes = [24, 128], strides = [1, 1]} : vector<24x768xf32> to vector<24x128xf32>
    %46 = arith.truncf %45 : vector<24x128xf32> to vector<24x128xbf16>
    %47 = vector.extract_strided_slice %38 {offsets = [0, 256], sizes = [24, 128], strides = [1, 1]} : vector<24x768xf32> to vector<24x128xf32>
    %48 = arith.truncf %47 : vector<24x128xf32> to vector<24x128xbf16>
    %cst_21 = arith.constant dense<0.000000e+00> : vector<24x24xf32>
    %49 = tpu.matmul %44, %46, %cst_21 {dimension_numbers = #tpu.dot_dimension_numbers<[1], [1], [0], [0], [0, 0, 1, 0], [], []>} : vector<24x128xbf16>, vector<24x128xbf16>, vector<24x24xf32> -> vector<24x24xf32>
    %cst_22 = arith.constant 1.250000e-01 : f32
    %50 = vector.broadcast %cst_22 : f32 to vector<24x24xf32>
    %51 = arith.mulf %49, %50 : vector<24x24xf32>
    %cst_23 = arith.constant -1.000000e+30 : f32
    %52 = vector.broadcast %cst_23 : f32 to vector<24x24xf32>
    %53 = arith.select %41, %51, %52 : vector<24x24xi1>, vector<24x24xf32>
    %cst_24 = arith.constant dense<0xFF800000> : vector<24xf32>
    %54 = vector.multi_reduction <maximumf>, %53, %cst_24 [1] : vector<24x24xf32> to vector<24xf32>
    %55 = vector.shape_cast %54 : vector<24xf32> to vector<24x1xf32>
    %56 = vector.broadcast %55 : vector<24x1xf32> to vector<24x24xf32>
    %57 = arith.subf %53, %56 : vector<24x24xf32>
    %58 = math.exp %57 : vector<24x24xf32>
    %cst_25 = arith.constant dense<0.000000e+00> : vector<24xf32>
    %59 = vector.multi_reduction <add>, %58, %cst_25 [1] : vector<24x24xf32> to vector<24xf32>
    %60 = vector.shape_cast %59 : vector<24xf32> to vector<24x1xf32>
    %61 = tpu.reciprocal %60 {approx = true} : vector<24x1xf32> -> vector<24x1xf32>
    %62 = vector.broadcast %61 : vector<24x1xf32> to vector<24x24xf32>
    %63 = arith.mulf %58, %62 : vector<24x24xf32>
    %64 = arith.truncf %63 : vector<24x24xf32> to vector<24x24xbf16>
    %cst_26 = arith.constant dense<0.000000e+00> : vector<24x128xf32>
    %65 = tpu.matmul %64, %48, %cst_26 {dimension_numbers = #tpu.dot_dimension_numbers<[1], [0], [0], [1], [0, 0, 1, 1], [], []>} : vector<24x24xbf16>, vector<24x128xbf16>, vector<24x128xf32> -> vector<24x128xf32>
    %66 = arith.truncf %65 : vector<24x128xf32> to vector<24x128xbf16>
    %c0_27 = arith.constant 0 : index
    %c0_28 = arith.constant 0 : index
    %c0_29 = arith.constant 0 : index
    %67 = vector.load %arg9[%c0_27, %c0_28, %c0_29] : memref<1x256x128xbf16, #tpu.memory_space<vmem>>, vector<1x128x128xbf16>
    %68 = vector.shape_cast %67 : vector<1x128x128xbf16> to vector<128x128xbf16>
    %cst_30 = arith.constant dense<0.000000e+00> : vector<24x128xf32>
    %69 = tpu.matmul %66, %68, %cst_30 {dimension_numbers = #tpu.dot_dimension_numbers<[1], [0], [0], [1], [0, 0, 1, 1], [], []>} : vector<24x128xbf16>, vector<128x128xbf16>, vector<24x128xf32> -> vector<24x128xf32>
    %70 = arith.addf %42, %69 : vector<24x128xf32>
    %71 = vector.extract_strided_slice %38 {offsets = [0, 384], sizes = [24, 128], strides = [1, 1]} : vector<24x768xf32> to vector<24x128xf32>
    %72 = arith.truncf %71 : vector<24x128xf32> to vector<24x128xbf16>
    %73 = vector.extract_strided_slice %38 {offsets = [0, 512], sizes = [24, 128], strides = [1, 1]} : vector<24x768xf32> to vector<24x128xf32>
    %74 = arith.truncf %73 : vector<24x128xf32> to vector<24x128xbf16>
    %75 = vector.extract_strided_slice %38 {offsets = [0, 640], sizes = [24, 128], strides = [1, 1]} : vector<24x768xf32> to vector<24x128xf32>
    %76 = arith.truncf %75 : vector<24x128xf32> to vector<24x128xbf16>
    %cst_31 = arith.constant dense<0.000000e+00> : vector<24x24xf32>
    %77 = tpu.matmul %72, %74, %cst_31 {dimension_numbers = #tpu.dot_dimension_numbers<[1], [1], [0], [0], [0, 0, 1, 0], [], []>} : vector<24x128xbf16>, vector<24x128xbf16>, vector<24x24xf32> -> vector<24x24xf32>
    %cst_32 = arith.constant 1.250000e-01 : f32
    %78 = vector.broadcast %cst_32 : f32 to vector<24x24xf32>
    %79 = arith.mulf %77, %78 : vector<24x24xf32>
    %cst_33 = arith.constant -1.000000e+30 : f32
    %80 = vector.broadcast %cst_33 : f32 to vector<24x24xf32>
    %81 = arith.select %41, %79, %80 : vector<24x24xi1>, vector<24x24xf32>
    %cst_34 = arith.constant dense<0xFF800000> : vector<24xf32>
    %82 = vector.multi_reduction <maximumf>, %81, %cst_34 [1] : vector<24x24xf32> to vector<24xf32>
    %83 = vector.shape_cast %82 : vector<24xf32> to vector<24x1xf32>
    %84 = vector.broadcast %83 : vector<24x1xf32> to vector<24x24xf32>
    %85 = arith.subf %81, %84 : vector<24x24xf32>
    %86 = math.exp %85 : vector<24x24xf32>
    %cst_35 = arith.constant dense<0.000000e+00> : vector<24xf32>
    %87 = vector.multi_reduction <add>, %86, %cst_35 [1] : vector<24x24xf32> to vector<24xf32>
    %88 = vector.shape_cast %87 : vector<24xf32> to vector<24x1xf32>
    %89 = tpu.reciprocal %88 {approx = true} : vector<24x1xf32> -> vector<24x1xf32>
    %90 = vector.broadcast %89 : vector<24x1xf32> to vector<24x24xf32>
    %91 = arith.mulf %86, %90 : vector<24x24xf32>
    %92 = arith.truncf %91 : vector<24x24xf32> to vector<24x24xbf16>
    %cst_36 = arith.constant dense<0.000000e+00> : vector<24x128xf32>
    %93 = tpu.matmul %92, %76, %cst_36 {dimension_numbers = #tpu.dot_dimension_numbers<[1], [0], [0], [1], [0, 0, 1, 1], [], []>} : vector<24x24xbf16>, vector<24x128xbf16>, vector<24x128xf32> -> vector<24x128xf32>
    %94 = arith.truncf %93 : vector<24x128xf32> to vector<24x128xbf16>
    %c0_37 = arith.constant 0 : index
    %c128 = arith.constant 128 : index
    %c0_38 = arith.constant 0 : index
    %95 = vector.load %arg9[%c0_37, %c128, %c0_38] : memref<1x256x128xbf16, #tpu.memory_space<vmem>>, vector<1x128x128xbf16>
    %96 = vector.shape_cast %95 : vector<1x128x128xbf16> to vector<128x128xbf16>
    %cst_39 = arith.constant dense<0.000000e+00> : vector<24x128xf32>
    %97 = tpu.matmul %94, %96, %cst_39 {dimension_numbers = #tpu.dot_dimension_numbers<[1], [0], [0], [1], [0, 0, 1, 1], [], []>} : vector<24x128xbf16>, vector<128x128xbf16>, vector<24x128xf32> -> vector<24x128xf32>
    %98 = arith.addf %70, %97 : vector<24x128xf32>
    %99 = arith.addf %4, %98 : vector<24x128xf32>
    %c0_40 = arith.constant 0 : index
    %c0_41 = arith.constant 0 : index
    %c0_42 = arith.constant 0 : index
    %100 = vector.load %arg10[%c0_40, %c0_41, %c0_42] : memref<1x1x128xf32, #tpu.memory_space<vmem>>, vector<1x1x128xf32>
    %101 = vector.shape_cast %100 : vector<1x1x128xf32> to vector<1x128xf32>
    %102 = vector.broadcast %101 : vector<1x128xf32> to vector<24x128xf32>
    %103 = arith.addf %99, %102 : vector<24x128xf32>
    %cst_43 = arith.constant dense<0.000000e+00> : vector<24xf32>
    %104 = vector.multi_reduction <add>, %103, %cst_43 [1] : vector<24x128xf32> to vector<24xf32>
    %105 = vector.shape_cast %104 : vector<24xf32> to vector<24x1xf32>
    %cst_44 = arith.constant 1.280000e+02 : f32
    %106 = vector.broadcast %cst_44 : f32 to vector<24x1xf32>
    %107 = arith.divf %105, %106 : vector<24x1xf32>
    %108 = vector.broadcast %107 : vector<24x1xf32> to vector<24x128xf32>
    %109 = arith.subf %103, %108 : vector<24x128xf32>
    %110 = arith.mulf %109, %109 : vector<24x128xf32>
    %cst_45 = arith.constant dense<0.000000e+00> : vector<24xf32>
    %111 = vector.multi_reduction <add>, %110, %cst_45 [1] : vector<24x128xf32> to vector<24xf32>
    %112 = vector.shape_cast %111 : vector<24xf32> to vector<24x1xf32>
    %cst_46 = arith.constant 1.280000e+02 : f32
    %113 = vector.broadcast %cst_46 : f32 to vector<24x1xf32>
    %114 = arith.divf %112, %113 : vector<24x1xf32>
    %115 = vector.broadcast %107 : vector<24x1xf32> to vector<24x128xf32>
    %116 = arith.subf %103, %115 : vector<24x128xf32>
    %cst_47 = arith.constant 9.99999997E-7 : f32
    %117 = vector.broadcast %cst_47 : f32 to vector<24x1xf32>
    %118 = arith.addf %114, %117 : vector<24x1xf32>
    %119 = math.rsqrt %118 : vector<24x1xf32>
    %120 = vector.broadcast %119 : vector<24x1xf32> to vector<24x128xf32>
    %121 = arith.mulf %116, %120 : vector<24x128xf32>
    %c0_48 = arith.constant 0 : index
    %c0_49 = arith.constant 0 : index
    %c0_50 = arith.constant 0 : index
    %122 = vector.load %arg11[%c0_48, %c0_49, %c0_50] : memref<1x1x128xf32, #tpu.memory_space<vmem>>, vector<1x1x128xf32>
    %123 = vector.shape_cast %122 : vector<1x1x128xf32> to vector<1x128xf32>
    %124 = vector.broadcast %123 : vector<1x128xf32> to vector<24x128xf32>
    %125 = arith.mulf %121, %124 : vector<24x128xf32>
    %c0_51 = arith.constant 0 : index
    %c0_52 = arith.constant 0 : index
    %c0_53 = arith.constant 0 : index
    %126 = vector.load %arg12[%c0_51, %c0_52, %c0_53] : memref<1x1x128xf32, #tpu.memory_space<vmem>>, vector<1x1x128xf32>
    %127 = vector.shape_cast %126 : vector<1x1x128xf32> to vector<1x128xf32>
    %128 = vector.broadcast %127 : vector<1x128xf32> to vector<24x128xf32>
    %129 = arith.addf %125, %128 : vector<24x128xf32>
    %130 = arith.truncf %129 : vector<24x128xf32> to vector<24x128xbf16>
    %c0_54 = arith.constant 0 : index
    %c0_55 = arith.constant 0 : index
    %c0_56 = arith.constant 0 : index
    %131 = vector.load %arg13[%c0_54, %c0_55, %c0_56] : memref<1x128x256xbf16, #tpu.memory_space<vmem>>, vector<1x128x256xbf16>
    %132 = vector.shape_cast %131 : vector<1x128x256xbf16> to vector<128x256xbf16>
    %cst_57 = arith.constant dense<0.000000e+00> : vector<24x256xf32>
    %133 = tpu.matmul %130, %132, %cst_57 {dimension_numbers = #tpu.dot_dimension_numbers<[1], [0], [0], [1], [0, 0, 1, 1], [], []>} : vector<24x128xbf16>, vector<128x256xbf16>, vector<24x256xf32> -> vector<24x256xf32>
    %c0_58 = arith.constant 0 : index
    %c0_59 = arith.constant 0 : index
    %c0_60 = arith.constant 0 : index
    %134 = vector.load %arg14[%c0_58, %c0_59, %c0_60] : memref<1x1x256xf32, #tpu.memory_space<vmem>>, vector<1x1x256xf32>
    %135 = vector.shape_cast %134 : vector<1x1x256xf32> to vector<1x256xf32>
    %136 = vector.broadcast %135 : vector<1x256xf32> to vector<24x256xf32>
    %137 = arith.addf %133, %136 : vector<24x256xf32>
    %cst_61 = arith.constant 5.000000e-01 : f32
    %138 = vector.broadcast %cst_61 : f32 to vector<24x256xf32>
    %139 = arith.mulf %138, %137 : vector<24x256xf32>
    %cst_62 = arith.constant 0.707106769 : f32
    %140 = vector.broadcast %cst_62 : f32 to vector<24x256xf32>
    %141 = arith.mulf %137, %140 : vector<24x256xf32>
    %142 = math.erf %141 : vector<24x256xf32>
    %cst_63 = arith.constant 1.000000e+00 : f32
    %143 = vector.broadcast %cst_63 : f32 to vector<24x256xf32>
    %144 = arith.addf %143, %142 : vector<24x256xf32>
    %145 = arith.mulf %139, %144 : vector<24x256xf32>
    %146 = arith.truncf %145 : vector<24x256xf32> to vector<24x256xbf16>
    %c0_64 = arith.constant 0 : index
    %c0_65 = arith.constant 0 : index
    %c0_66 = arith.constant 0 : index
    %147 = vector.load %arg15[%c0_64, %c0_65, %c0_66] : memref<1x256x128xbf16, #tpu.memory_space<vmem>>, vector<1x256x128xbf16>
    %148 = vector.shape_cast %147 : vector<1x256x128xbf16> to vector<256x128xbf16>
    %cst_67 = arith.constant dense<0.000000e+00> : vector<24x128xf32>
    %149 = tpu.matmul %146, %148, %cst_67 {dimension_numbers = #tpu.dot_dimension_numbers<[1], [0], [0], [1], [0, 0, 1, 1], [], []>} : vector<24x256xbf16>, vector<256x128xbf16>, vector<24x128xf32> -> vector<24x128xf32>
    %c0_68 = arith.constant 0 : index
    %c0_69 = arith.constant 0 : index
    %c0_70 = arith.constant 0 : index
    %150 = vector.load %arg16[%c0_68, %c0_69, %c0_70] : memref<1x1x128xf32, #tpu.memory_space<vmem>>, vector<1x1x128xf32>
    %151 = vector.shape_cast %150 : vector<1x1x128xf32> to vector<1x128xf32>
    %152 = vector.broadcast %151 : vector<1x128xf32> to vector<24x128xf32>
    %153 = arith.addf %149, %152 : vector<24x128xf32>
    %154 = arith.addf %103, %153 : vector<24x128xf32>
    %c0_71 = arith.constant 0 : index
    %c0_72 = arith.constant 0 : index
    %c0_73 = arith.constant 0 : index
    %155 = vector.load %arg17[%c0_71, %c0_72, %c0_73] : memref<1x24x128xf32, #tpu.memory_space<vmem>>, vector<1x24x128xf32>
    %156 = vector.shape_cast %155 : vector<1x24x128xf32> to vector<24x128xf32>
    %157 = vector.shape_cast %154 : vector<24x128xf32> to vector<1x24x128xf32>
    tpu.vector_store %arg17[%c0_71, %c0_72, %c0_73], %157 {strides = array<i32>} : memref<1x24x128xf32, #tpu.memory_space<vmem>>, vector<1x24x128xf32>,
    return
  }
  func.func @transform_0(%arg0: i32, %arg1: i32) -> (i32, i32, i32) {
    %c0_i32 = arith.constant 0 : i32
    %c0_i32_0 = arith.constant 0 : i32
    %c0_i32_1 = arith.constant 0 : i32
    return %arg0, %c0_i32, %c0_i32_0 : i32, i32, i32
  }
  func.func @transform_1(%arg0: i32, %arg1: i32) -> (i32, i32) {
    %c0_i32 = arith.constant 0 : i32
    %c0_i32_0 = arith.constant 0 : i32
    %c0_i32_1 = arith.constant 0 : i32
    return %c0_i32, %c0_i32_0 : i32, i32
  }
  func.func @transform_2(%arg0: i32, %arg1: i32) -> (i32, i32) {
    %c0_i32 = arith.constant 0 : i32
    %c0_i32_0 = arith.constant 0 : i32
    %c0_i32_1 = arith.constant 0 : i32
    return %c0_i32, %c0_i32_0 : i32, i32
  }
  func.func @transform_3(%arg0: i32, %arg1: i32) -> (i32, i32, i32) {
    %c0_i32 = arith.constant 0 : i32
    %c0_i32_0 = arith.constant 0 : i32
    %c0_i32_1 = arith.constant 0 : i32
    return %arg1, %c0_i32, %c0_i32_0 : i32, i32, i32
  }
  func.func @transform_4(%arg0: i32, %arg1: i32) -> (i32, i32, i32) {
    %c0_i32 = arith.constant 0 : i32
    %c0_i32_0 = arith.constant 0 : i32
    %c0_i32_1 = arith.constant 0 : i32
    return %arg1, %c0_i32, %c0_i32_0 : i32, i32, i32
  }
  func.func @transform_5(%arg0: i32, %arg1: i32) -> (i32, i32, i32) {
    %c0_i32 = arith.constant 0 : i32
    %c0_i32_0 = arith.constant 0 : i32
    %c0_i32_1 = arith.constant 0 : i32
    return %arg1, %c0_i32, %c0_i32_0 : i32, i32, i32
  }
  func.func @transform_6(%arg0: i32, %arg1: i32) -> (i32, i32, i32) {
    %c0_i32 = arith.constant 0 : i32
    %c0_i32_0 = arith.constant 0 : i32
    %c0_i32_1 = arith.constant 0 : i32
    return %arg1, %c0_i32, %c0_i32_0 : i32, i32, i32
  }
  func.func @transform_7(%arg0: i32, %arg1: i32) -> (i32, i32, i32) {
    %c0_i32 = arith.constant 0 : i32
    %c0_i32_0 = arith.constant 0 : i32
    %c0_i32_1 = arith.constant 0 : i32
    return %arg1, %c0_i32, %c0_i32_0 : i32, i32, i32
  }
  func.func @transform_8(%arg0: i32, %arg1: i32) -> (i32, i32, i32) {
    %c0_i32 = arith.constant 0 : i32
    %c0_i32_0 = arith.constant 0 : i32
    %c0_i32_1 = arith.constant 0 : i32
    return %arg1, %c0_i32, %c0_i32_0 : i32, i32, i32
  }
  func.func @transform_9(%arg0: i32, %arg1: i32) -> (i32, i32, i32) {
    %c0_i32 = arith.constant 0 : i32
    %c0_i32_0 = arith.constant 0 : i32
    %c0_i32_1 = arith.constant 0 : i32
    return %arg1, %c0_i32, %c0_i32_0 : i32, i32, i32
  }
  func.func @transform_10(%arg0: i32, %arg1: i32) -> (i32, i32, i32) {
    %c0_i32 = arith.constant 0 : i32
    %c0_i32_0 = arith.constant 0 : i32
    %c0_i32_1 = arith.constant 0 : i32
    return %arg1, %c0_i32, %c0_i32_0 : i32, i32, i32
  }
  func.func @transform_11(%arg0: i32, %arg1: i32) -> (i32, i32, i32) {
    %c0_i32 = arith.constant 0 : i32
    %c0_i32_0 = arith.constant 0 : i32
    %c0_i32_1 = arith.constant 0 : i32
    return %arg1, %c0_i32, %c0_i32_0 : i32, i32, i32
  }
  func.func @transform_12(%arg0: i32, %arg1: i32) -> (i32, i32, i32) {
    %c0_i32 = arith.constant 0 : i32
    %c0_i32_0 = arith.constant 0 : i32
    %c0_i32_1 = arith.constant 0 : i32
    return %arg1, %c0_i32, %c0_i32_0 : i32, i32, i32
  }
  func.func @transform_13(%arg0: i32, %arg1: i32) -> (i32, i32, i32) {
    %c0_i32 = arith.constant 0 : i32
    %c0_i32_0 = arith.constant 0 : i32
    %c0_i32_1 = arith.constant 0 : i32
    return %arg1, %c0_i32, %c0_i32_0 : i32, i32, i32
  }
  func.func @transform_14(%arg0: i32, %arg1: i32) -> (i32, i32, i32) {
    %c0_i32 = arith.constant 0 : i32
    %c0_i32_0 = arith.constant 0 : i32
    %c0_i32_1 = arith.constant 0 : i32
    return %arg1, %c0_i32, %c0_i32_0 : i32, i32, i32
  }
  func.func @transform_15(%arg0: i32, %arg1: i32) -> (i32, i32, i32) {
    %c0_i32 = arith.constant 0 : i32
    %c0_i32_0 = arith.constant 0 : i32
    %c0_i32_1 = arith.constant 0 : i32
    return %arg0, %c0_i32, %c0_i32_0 : i32, i32, i32
  }
}

</mosaic_0001>

<llo_original>
// kernel: font_classifier_forward.3
$region0: #{font_classifier_forward.3}
  #allocation0 [shape = 'u32[]', space=smem, size = 0x4, offset = 0x4, fixed_abs, tag = 'smem constant byte address 0x4 - core index']
  #allocation1 [shape = 'u32[144,128]{1,0:T(1,128)}', space=vmem, size = 0x12000, scoped, tag = 'internal scratch']
  %s0 = inlined_call_operand.vmem [shape: f32[2,24,128], index: 0, kind: input, shape index: {}]
  %s1 = inlined_call_operand.vmem [shape: f32[1,128], index: 1, kind: input, shape index: {}]
  %s2 = inlined_call_operand.vmem [shape: f32[1,128], index: 2, kind: input, shape index: {}]
  %s3 = inlined_call_operand.vmem [shape: bf16[128,128], index: 3, kind: input, shape index: {}]
  %s4 = inlined_call_operand.vmem [shape: f32[1,128], index: 4, kind: input, shape index: {}]
  %s5 = inlined_call_operand.hbm [shape: f32[2,128], index: 5, kind: output, shape index: {}]
  %s6 = sld [smem:[#allocation0]]
  $region30: #{font_classifier_forward.3} parent=0
    _
  %s8 = ssub.s32 1, %s6
  %s9 = scalar_select 0, %s8, %s6
  $region1: #{font_classifier_forward.3} parent=0
    #allocation2 [shape = 'u8[1024]{0}', space=vmem, size = 0x400, scoped, tag = 'output window, operand 0, single buffered']
    #allocation3 [shape = 's32[1]{0}', space=sflag, size = 0x4, scoped, tag = 'scoped memory for font_classifier_forward.3']
    %10 = vsyncpa [#allocation3], 0
    // Predicated region
    $region2: #{font_classifier_forward.3} parent=1 // pred_check
      _
    $region3: #{font_classifier_forward.3} parent=1 // pred_check_branch
      %12 = sbr.rel (0) target = $region5
    $region4: #{font_classifier_forward.3} parent=1 // pred_region
      _
    $region5: #{font_classifier_forward.3} parent=1 // pred_fallthru
      _
    // Predicated region
    $region6: #{font_classifier_forward.3} parent=1 // pred_check
      _
    $region7: #{font_classifier_forward.3} parent=1 // pred_check_branch
      %14 = sbr.rel (0) target = $region9
    $region8: #{font_classifier_forward.3} parent=1 // pred_region
      _
    $region9: #{font_classifier_forward.3} parent=1 // pred_fallthru
      _
    // Predicated region
    $region10: #{font_classifier_forward.3} parent=1 // pred_check
      _
    $region11: #{font_classifier_forward.3} parent=1 // pred_check_branch
      %16 = sbr.rel (0) target = $region13
    $region12: #{font_classifier_forward.3} parent=1 // pred_region
      _
    $region13: #{font_classifier_forward.3} parent=1 // pred_fallthru
      _
    // Predicated region
    $region14: #{font_classifier_forward.3} parent=1 // pred_check
      _
    $region15: #{font_classifier_forward.3} parent=1 // pred_check_branch
      %18 = sbr.rel (0) target = $region17
    $region16: #{font_classifier_forward.3} parent=1 // pred_region
      _
    $region17: #{font_classifier_forward.3} parent=1 // pred_fallthru
      _
    // Predicated region
    $region18: #{font_classifier_forward.3} parent=1 // pred_check
      _
    $region19: #{font_classifier_forward.3} parent=1 // pred_check_branch
      %20 = sbr.rel (0) target = $region21
    $region20: #{font_classifier_forward.3} parent=1 // pred_region
      _
    $region21: #{font_classifier_forward.3} parent=1 // pred_fallthru
      _
    %v22 = vld [vmem:[%s0] sm:$0xff]
    %v23 = vld [vmem:[%s0 + $0x18] sm:$0xff]
    %v26 = vrot.slane %v23, 7
    %vm27 = vcmask 1041409
    %v28 = vsel %vm27, %v26, %v22
    %vm30 = vcmask 1041408
    %v31 = vsel %vm30, %v28, 0.0
    %32 = vadd.xlane.f32.xlu0 %v31
    %v33 = vpop.xlane.xlu0 %32
    %v34 = vrcp.pop 128.0
    %v35 = vmul.f32 %v33, %v34
    %v37 = vrot.slane %v35, 1
    %v40 = vsub.f32 %v22, %v35
    %v41 = vsub.f32 %v23, %v37
    %v42 = vmul.f32 %v40, %v40
    %v43 = vmul.f32 %v41, %v41
    %v46 = vrot.slane %v43, 7
    %v47 = vsel %vm27, %v46, %v42
    %v49 = vsel %vm30, %v47, 0.0
    %50 = vadd.xlane.f32.xlu0 %v49
    %v51 = vpop.xlane.xlu0 %50
    %v52 = vmul.f32 %v51, %v34
    %v53 = vadd.f32 %v52, 1e-06
    %v54 = vrsqrt.pop %v53
    %v56 = vrot.slane %v54, 1
    %v59 = vmul.f32 %v40, %v54
    %v60 = vmul.f32 %v41, %v56
    %v61 = vld [vmem:[%s1] sm:$0x1]
    %v63 = vlaneseq
    %v64 = vshrl.u32 %v63, 7
    %v65 = vsub.s32 0, %v64
    %v66 = vrot.slane %v61, %v65
    %v68 = vmul.f32 %v59, %v66
    %v69 = vmul.f32 %v60, %v66
    %v70 = vld [vmem:[%s2] sm:$0x1]
    %v72 = vlaneseq
    %v73 = vshrl.u32 %v72, 7
    %v74 = vsub.s32 0, %v73
    %v75 = vrot.slane %v70, %v74
    %v77 = vadd.f32 %v68, %v75
    %v78 = vadd.f32 %v69, %v75
    %v79 = vpack.c.bf16 %v77, %v77
    %v80 = vpack.c.bf16 %v78, %v78
    %v81 = vld [vmem:[%s3] sm:$0xf]
    %v82 = vld [vmem:[%s3 + $0x4] sm:$0xf]
    %v83 = vld [vmem:[%s3 + $0x8] sm:$0xf]
    %v84 = vld [vmem:[%s3 + $0xc] sm:$0xf]
    %v85 = vld [vmem:[%s3 + $0x10] sm:$0xf]
    %v86 = vld [vmem:[%s3 + $0x14] sm:$0xf]
    %v87 = vld [vmem:[%s3 + $0x18] sm:$0xf]
    %v88 = vld [vmem:[%s3 + $0x1c] sm:$0xf]
    %v89 = vld [vmem:[%s3 + $0x20] sm:$0xf]
    %v90 = vld [vmem:[%s3 + $0x24] sm:$0xf]
    %v91 = vld [vmem:[%s3 + $0x28] sm:$0xf]
    %v92 = vld [vmem:[%s3 + $0x2c] sm:$0xf]
    %v93 = vld [vmem:[%s3 + $0x30] sm:$0xf]
    %v94 = vld [vmem:[%s3 + $0x34] sm:$0xf]
    %v95 = vld [vmem:[%s3 + $0x38] sm:$0xf]
    %v96 = vld [vmem:[%s3 + $0x3c] sm:$0xf]
    %v97 = vld [vmem:[%s4] sm:$0x1]
    %v99 = vlaneseq
    %v100 = vshrl.u32 %v99, 7
    %v101 = vsub.s32 0, %v100
    %v102 = vrot.slane %v97, %v101
    %v106 = vunpack.c.l.b16 %v79
    %v107 = vunpack.c.l.b16 %v80
    %v108 = vrot.slane %v107, 7
    %v109 = vsel %vm27, %v108, %v106
    %v110 = vpack.c.b16 %v109, %v109
    %v128 = vunpack.c.l.b16 %v81
    %v129 = vunpack.c.l.b16 %v82
    %v130 = vunpack.c.l.b16 %v83
    %v131 = vunpack.c.l.b16 %v84
    %v132 = vunpack.c.l.b16 %v85
    %v133 = vunpack.c.l.b16 %v86
    %v134 = vunpack.c.l.b16 %v87
    %v135 = vunpack.c.l.b16 %v88
    %v136 = vunpack.c.l.b16 %v89
    %v137 = vunpack.c.l.b16 %v90
    %v138 = vunpack.c.l.b16 %v91
    %v139 = vunpack.c.l.b16 %v92
    %v140 = vunpack.c.l.b16 %v93
    %v141 = vunpack.c.l.b16 %v94
    %v142 = vunpack.c.l.b16 %v95
    %v143 = vunpack.c.l.b16 %v96
    %v144 = vpack.c.b16 %v129, %v128
    %v145 = vpack.c.b16 %v131, %v130
    %v146 = vpack.c.b16 %v133, %v132
    %v147 = vpack.c.b16 %v135, %v134
    %v148 = vpack.c.b16 %v137, %v136
    %v149 = vpack.c.b16 %v139, %v138
    %v150 = vpack.c.b16 %v141, %v140
    %v151 = vpack.c.b16 %v143, %v142
    %160 = vmatprep.subr.bf16.mxu0 0
    %161 = vmatpush1.bf16.msra.mxu0 %v151
    %162 = vmatprep.subr.bf16.mxu0 0
    %163 = vmatpush1.bf16.msra.mxu0 %v150
    %164 = vmatprep.subr.bf16.mxu0 0
    %165 = vmatpush1.bf16.msra.mxu0 %v149
    %166 = vmatprep.subr.bf16.mxu0 0
    %167 = vmatpush1.bf16.msra.mxu0 %v148
    %168 = vmatprep.subr.bf16.mxu0 0
    %169 = vmatpush1.bf16.msra.mxu0 %v147
    %170 = vmatprep.subr.bf16.mxu0 0
    %171 = vmatpush1.bf16.msra.mxu0 %v146
    %172 = vmatprep.subr.bf16.mxu0 0
    %173 = vmatpush1.bf16.msra.mxu0 %v145
    %174 = vmatprep.subr.bf16.mxu0 0
    %175 = vmatpush1.bf16.msra.mxu0 %v144
    %176 = vmatprep.subr.bf16.mxu0 0
    %177 = vmatpush2.bf16.msra.mxu0 0
    %178 = vmatprep.subr.bf16.mxu0 0
    %179 = vmatpush2.bf16.msra.mxu0 0
    %180 = vmatprep.subr.bf16.mxu0 0
    %181 = vmatpush2.bf16.msra.mxu0 0
    %182 = vmatprep.subr.bf16.mxu0 0
    %183 = vmatpush2.bf16.msra.mxu0 0
    %184 = vmatprep.subr.bf16.mxu0 0
    %185 = vmatpush2.bf16.msra.mxu0 0
    %186 = vmatprep.subr.bf16.mxu0 0
    %187 = vmatpush2.bf16.msra.mxu0 0
    %188 = vmatprep.subr.bf16.mxu0 0
    %189 = vmatpush2.bf16.msra.mxu0 0
    %190 = vmatprep.subr.bf16.mxu0 0
    %191 = vmatpush2.bf16.msra.mxu0 0
    %192 = vmatprep.mubr.bf16.mxu0 0
    %193 = vmatmul.mubr.bf16.gmra.mxu0 %v110
    %v194 = vpop.f32.mrf.mxu0
    %v195 = vadd.f32 %v102, %v194
    %v196 = vpop.f32.mrf.mxu0
    %v197 = vpop.f32.mrf.mxu0
    %v198 = vpop.f32.mrf.mxu0
    %199 = vdwg.mxu0
    %200 = vst [vmem:[#allocation2] sm:$0x3] %v195
    // Predicated region
    $region22: #{font_classifier_forward.3} parent=1 // pred_check
      _
    $region23: #{font_classifier_forward.3} parent=1 // pred_check_branch
      %202 = sbr.rel (0) target = $region25
    $region24: #{font_classifier_forward.3} parent=1 // pred_region
      %s204 = ssub.s32 32, 32
      %205 = vsyncadd [#allocation3], %s204
      %s207 = sshll.u32 [#allocation2], 4
      %s208 = int_to_ptr.vmem [resolvable:$true] %s207
      %210 = dma.vmem_to_hbm [thread:$0]  %s208, 32, %s5, [#allocation3]
    $region25: #{font_classifier_forward.3} parent=1 // pred_fallthru
      _
    // Predicated region
    $region26: #{font_classifier_forward.3} parent=1 // pred_check
      _
    $region27: #{font_classifier_forward.3} parent=1 // pred_check_branch
      %212 = sbr.rel (0) target = $region29
    $region28: #{font_classifier_forward.3} parent=1 // pred_region
      %213 = dma.done [#allocation3], 32
    $region29: #{font_classifier_forward.3} parent=1 // pred_fallthru
      _
    %214 = vsyncpa [#allocation3], 1

// kernel: font_classifier_forward.2
$region0: #{font_classifier_forward.2}
  #allocation0 [shape = 'u32[]', space=smem, size = 0x4, offset = 0x4, fixed_abs, tag = 'smem constant byte address 0x4 - core index']
  #allocation1 [shape = 'u32[144,128]{1,0:T(1,128)}', space=vmem, size = 0x12000, scoped, tag = 'internal scratch']
  %s0 = inlined_call_operand.vmem [shape: f32[2,24,192], index: 0, kind: input, shape index: {}]
  %s1 = inlined_call_operand.vmem [shape: bf16[192,128], index: 1, kind: input, shape index: {}]
  %s2 = inlined_call_operand.vmem [shape: f32[24,128], index: 2, kind: input, shape index: {}]
  %s3 = inlined_call_operand.vmem [shape: f32[2,1,128], index: 3, kind: input, shape index: {}]
  %s4 = inlined_call_operand.vmem [shape: f32[2,1,128], index: 4, kind: input, shape index: {}]
  %s5 = inlined_call_operand.vmem [shape: bf16[2,128,768], index: 5, kind: input, shape index: {}]
  %s6 = inlined_call_operand.vmem [shape: f32[2,1,768], index: 6, kind: input, shape index: {}]
  %s7 = inlined_call_operand.vmem [shape: bf16[2,256,128], index: 7, kind: input, shape index: {}]
  %s8 = inlined_call_operand.vmem [shape: f32[2,1,128], index: 8, kind: input, shape index: {}]
  %s9 = inlined_call_operand.vmem [shape: f32[2,1,128], index: 9, kind: input, shape index: {}]
  %s10 = inlined_call_operand.vmem [shape: f32[2,1,128], index: 10, kind: input, shape index: {}]
  %s11 = inlined_call_operand.vmem [shape: bf16[2,128,256], index: 11, kind: input, shape index: {}]
  %s12 = inlined_call_operand.vmem [shape: f32[2,1,256], index: 12, kind: input, shape index: {}]
  %s13 = inlined_call_operand.vmem [shape: bf16[2,256,128], index: 13, kind: input, shape index: {}]
  %s14 = inlined_call_operand.vmem [shape: f32[2,1,128], index: 14, kind: input, shape index: {}]
  %s15 = inlined_call_operand.vmem [shape: f32[2,24,128], index: 15, kind: output, shape index: {}]
  %s16 = sld [smem:[#allocation0]]
  $region97: #{font_classifier_forward.2} parent=0
    _
  %s18 = ssub.s32 1, %s16
  %s19 = scalar_select 0, %s18, %s16
  loop: start=0, step=1, limit=6
  $region2: #{font_classifier_forward.2} parent=0 // loop_pre_header
    _
  $region3: #{font_classifier_forward.2} parent=0 // loop_header
    %s21 = sphi 0, %s25
    %p22 = scmp.ge.s32.totalorder %s21, 6
    %s28 = sphi 0, %s40
    %s29 = sphi 0, %s36
    %s30 = sphi 0, %s28
    %s31 = sphi 0, %s29
    %s32 = sphi 0, %s30
    %s33 = sphi 0, %s31
    %s43 = sphi 0, %s45
    %s46 = sphi 0, %s43
    %s47 = sphi 0, %s46
    %s63 = sphi 0, %s47
    %s67 = sphi 0, %s67
    %s69 = sphi 0, %s67
    %s70 = sphi 0, %s69
    %s84 = sphi 0, %s70
    %s88 = sphi 0, %s88
    %s90 = sphi 0, %s88
    %s91 = sphi 0, %s90
    %s105 = sphi 0, %s91
    %s111 = sphi 0, %s113
    %s114 = sphi 0, %s111
    %s115 = sphi 0, %s114
    %s131 = sphi 0, %s115
    %s137 = sphi 0, %s139
    %s140 = sphi 0, %s137
    %s141 = sphi 0, %s140
    %s157 = sphi 0, %s141
    %s163 = sphi 0, %s165
    %s166 = sphi 0, %s163
    %s167 = sphi 0, %s166
    %s183 = sphi 0, %s167
    %s189 = sphi 0, %s191
    %s192 = sphi 0, %s189
    %s193 = sphi 0, %s192
    %s209 = sphi 0, %s193
    %s215 = sphi 0, %s217
    %s218 = sphi 0, %s215
    %s219 = sphi 0, %s218
    %s235 = sphi 0, %s219
    %s241 = sphi 0, %s243
    %s244 = sphi 0, %s241
    %s245 = sphi 0, %s244
    %s261 = sphi 0, %s245
    %s267 = sphi 0, %s269
    %s270 = sphi 0, %s267
    %s271 = sphi 0, %s270
    %s287 = sphi 0, %s271
    %s293 = sphi 0, %s295
    %s296 = sphi 0, %s293
    %s297 = sphi 0, %s296
    %s313 = sphi 0, %s297
    %s319 = sphi 0, %s321
    %s322 = sphi 0, %s319
    %s323 = sphi 0, %s322
    %s339 = sphi 0, %s323
    %s345 = sphi 0, %s347
    %s348 = sphi 0, %s345
    %s349 = sphi 0, %s348
    %s365 = sphi 0, %s349
    %s371 = sphi 0, %s373
    %s374 = sphi 0, %s371
    %s375 = sphi 0, %s374
    %s391 = sphi 0, %s375
    %s397 = sphi 0, %s399
    %s400 = sphi 0, %s397
    %s401 = sphi 0, %s400
    %s417 = sphi 0, %s401
    %s423 = sphi 0, %s425
    %s426 = sphi 0, %s423
    %s427 = sphi 0, %s426
    %s443 = sphi 0, %s427
  $region4: #{font_classifier_forward.2} parent=0 // loop_header_branch
    %24 = sbr.rel (%p22) target = $region8
  $region5: #{font_classifier_forward.2} parent=0 // loop_body
    %s26 = ssub.s32 %s21, 1
    %s27 = ssub.s32 %s21, 2
    %s34 = sadd.s32 1, %s29
    %p35 = scmp.ge.s32.totalorder %s34, 2
    %s36 = scalar_select %p35, 0, %s34
    %s37 = sadd.s32 1, %s28
    %s38 = scalar_select %p35, %s37, %s28
    %p39 = scmp.ge.s32.totalorder %s38, 2
    %s40 = scalar_select %p39, 0, %s38
    %s41 = ssub.s32 %s28, %s40
    %p42 = scmp.eq.s32.totalorder %s41, 0
    %s44 = sadd.s32 %s43, 1
    %s45 = scalar_select %p42, %s43, %s44
    %p48 = pneg %p42
    %p49 = scmp.eq.s32.totalorder %s21, 3
    %p50 = por %p48, %p49
    %p51 = scmp.ne.s32.totalorder %s43, %s46
    %p52 = scmp.eq.s32.totalorder %s21, 0
    %p53 = por %p51, %p52
    %p54 = scmp.ne.s32.totalorder %s43, %s46
    %p55 = scmp.eq.s32.totalorder %s26, 3
    %p56 = por %p54, %p55
    %p57 = scmp.ne.s32.totalorder %s46, %s47
    %p58 = scmp.eq.s32.totalorder %s26, 0
    %p59 = por %p57, %p58
    %p60 = scmp.ne.s32.totalorder %s46, %s47
    %p61 = scmp.eq.s32.totalorder %s27, 3
    %p62 = por %p60, %p61
    %p64 = scmp.ne.s32.totalorder %s47, %s63
    %p65 = scmp.eq.s32.totalorder %s27, 0
    %p66 = por %p64, %p65
    %s68 = sadd.s32 %s67, 1
    %p71 = scmp.eq.s32.totalorder %s21, 3
    %p72 = scmp.ne.s32.totalorder %s67, %s69
    %p73 = scmp.eq.s32.totalorder %s21, 0
    %p74 = por %p72, %p73
    %p75 = scmp.ne.s32.totalorder %s67, %s69
    %p76 = scmp.eq.s32.totalorder %s26, 3
    %p77 = por %p75, %p76
    %p78 = scmp.ne.s32.totalorder %s69, %s70
    %p79 = scmp.eq.s32.totalorder %s26, 0
    %p80 = por %p78, %p79
    %p81 = scmp.ne.s32.totalorder %s69, %s70
    %p82 = scmp.eq.s32.totalorder %s27, 3
    %p83 = por %p81, %p82
    %p85 = scmp.ne.s32.totalorder %s70, %s84
    %p86 = scmp.eq.s32.totalorder %s27, 0
    %p87 = por %p85, %p86
    %s89 = sadd.s32 %s88, 1
    %p92 = scmp.eq.s32.totalorder %s21, 3
    %p93 = scmp.ne.s32.totalorder %s88, %s90
    %p94 = scmp.eq.s32.totalorder %s21, 0
    %p95 = por %p93, %p94
    %p96 = scmp.ne.s32.totalorder %s88, %s90
    %p97 = scmp.eq.s32.totalorder %s26, 3
    %p98 = por %p96, %p97
    %p99 = scmp.ne.s32.totalorder %s90, %s91
    %p100 = scmp.eq.s32.totalorder %s26, 0
    %p101 = por %p99, %p100
    %p102 = scmp.ne.s32.totalorder %s90, %s91
    %p103 = scmp.eq.s32.totalorder %s27, 3
    %p104 = por %p102, %p103
    %p106 = scmp.ne.s32.totalorder %s91, %s105
    %p107 = scmp.eq.s32.totalorder %s27, 0
    %p108 = por %p106, %p107
    %s109 = ssub.s32 %s29, %s36
    %p110 = scmp.eq.s32.totalorder %s109, 0
    %s112 = sadd.s32 %s111, 1
    %s113 = scalar_select %p110, %s111, %s112
    %p116 = pneg %p110
    %p117 = scmp.eq.s32.totalorder %s21, 3
    %p118 = por %p116, %p117
    %p119 = scmp.ne.s32.totalorder %s111, %s114
    %p120 = scmp.eq.s32.totalorder %s21, 0
    %p121 = por %p119, %p120
    %p122 = scmp.ne.s32.totalorder %s111, %s114
    %p123 = scmp.eq.s32.totalorder %s26, 3
    %p124 = por %p122, %p123
    %p125 = scmp.ne.s32.totalorder %s114, %s115
    %p126 = scmp.eq.s32.totalorder %s26, 0
    %p127 = por %p125, %p126
    %p128 = scmp.ne.s32.totalorder %s114, %s115
    %p129 = scmp.eq.s32.totalorder %s27, 3
    %p130 = por %p128, %p129
    %p132 = scmp.ne.s32.totalorder %s115, %s131
    %p133 = scmp.eq.s32.totalorder %s27, 0
    %p134 = por %p132, %p133
    %s135 = ssub.s32 %s29, %s36
    %p136 = scmp.eq.s32.totalorder %s135, 0
    %s138 = sadd.s32 %s137, 1
    %s139 = scalar_select %p136, %s137, %s138
    %p142 = pneg %p136
    %p143 = scmp.eq.s32.totalorder %s21, 3
    %p144 = por %p142, %p143
    %p145 = scmp.ne.s32.totalorder %s137, %s140
    %p146 = scmp.eq.s32.totalorder %s21, 0
    %p147 = por %p145, %p146
    %p148 = scmp.ne.s32.totalorder %s137, %s140
    %p149 = scmp.eq.s32.totalorder %s26, 3
    %p150 = por %p148, %p149
    %p151 = scmp.ne.s32.totalorder %s140, %s141
    %p152 = scmp.eq.s32.totalorder %s26, 0
    %p153 = por %p151, %p152
    %p154 = scmp.ne.s32.totalorder %s140, %s141
    %p155 = scmp.eq.s32.totalorder %s27, 3
    %p156 = por %p154, %p155
    %p158 = scmp.ne.s32.totalorder %s141, %s157
    %p159 = scmp.eq.s32.totalorder %s27, 0
    %p160 = por %p158, %p159
    %s161 = ssub.s32 %s29, %s36
    %p162 = scmp.eq.s32.totalorder %s161, 0
    %s164 = sadd.s32 %s163, 1
    %s165 = scalar_select %p162, %s163, %s164
    %p168 = pneg %p162
    %p169 = scmp.eq.s32.totalorder %s21, 3
    %p170 = por %p168, %p169
    %p171 = scmp.ne.s32.totalorder %s163, %s166
    %p172 = scmp.eq.s32.totalorder %s21, 0
    %p173 = por %p171, %p172
    %p174 = scmp.ne.s32.totalorder %s163, %s166
    %p175 = scmp.eq.s32.totalorder %s26, 3
    %p176 = por %p174, %p175
    %p177 = scmp.ne.s32.totalorder %s166, %s167
    %p178 = scmp.eq.s32.totalorder %s26, 0
    %p179 = por %p177, %p178
    %p180 = scmp.ne.s32.totalorder %s166, %s167
    %p181 = scmp.eq.s32.totalorder %s27, 3
    %p182 = por %p180, %p181
    %p184 = scmp.ne.s32.totalorder %s167, %s183
    %p185 = scmp.eq.s32.totalorder %s27, 0
    %p186 = por %p184, %p185
    %s187 = ssub.s32 %s29, %s36
    %p188 = scmp.eq.s32.totalorder %s187, 0
    %s190 = sadd.s32 %s189, 1
    %s191 = scalar_select %p188, %s189, %s190
    %p194 = pneg %p188
    %p195 = scmp.eq.s32.totalorder %s21, 3
    %p196 = por %p194, %p195
    %p197 = scmp.ne.s32.totalorder %s189, %s192
    %p198 = scmp.eq.s32.totalorder %s21, 0
    %p199 = por %p197, %p198
    %p200 = scmp.ne.s32.totalorder %s189, %s192
    %p201 = scmp.eq.s32.totalorder %s26, 3
    %p202 = por %p200, %p201
    %p203 = scmp.ne.s32.totalorder %s192, %s193
    %p204 = scmp.eq.s32.totalorder %s26, 0
    %p205 = por %p203, %p204
    %p206 = scmp.ne.s32.totalorder %s192, %s193
    %p207 = scmp.eq.s32.totalorder %s27, 3
    %p208 = por %p206, %p207
    %p210 = scmp.ne.s32.totalorder %s193, %s209
    %p211 = scmp.eq.s32.totalorder %s27, 0
    %p212 = por %p210, %p211
    %s213 = ssub.s32 %s29, %s36
    %p214 = scmp.eq.s32.totalorder %s213, 0
    %s216 = sadd.s32 %s215, 1
    %s217 = scalar_select %p214, %s215, %s216
    %p220 = pneg %p214
    %p221 = scmp.eq.s32.totalorder %s21, 3
    %p222 = por %p220, %p221
    %p223 = scmp.ne.s32.totalorder %s215, %s218
    %p224 = scmp.eq.s32.totalorder %s21, 0
    %p225 = por %p223, %p224
    %p226 = scmp.ne.s32.totalorder %s215, %s218
    %p227 = scmp.eq.s32.totalorder %s26, 3
    %p228 = por %p226, %p227
    %p229 = scmp.ne.s32.totalorder %s218, %s219
    %p230 = scmp.eq.s32.totalorder %s26, 0
    %p231 = por %p229, %p230
    %p232 = scmp.ne.s32.totalorder %s218, %s219
    %p233 = scmp.eq.s32.totalorder %s27, 3
    %p234 = por %p232, %p233
    %p236 = scmp.ne.s32.totalorder %s219, %s235
    %p237 = scmp.eq.s32.totalorder %s27, 0
    %p238 = por %p236, %p237
    %s239 = ssub.s32 %s29, %s36
    %p240 = scmp.eq.s32.totalorder %s239, 0
    %s242 = sadd.s32 %s241, 1
    %s243 = scalar_select %p240, %s241, %s242
    %p246 = pneg %p240
    %p247 = scmp.eq.s32.totalorder %s21, 3
    %p248 = por %p246, %p247
    %p249 = scmp.ne.s32.totalorder %s241, %s244
    %p250 = scmp.eq.s32.totalorder %s21, 0
    %p251 = por %p249, %p250
    %p252 = scmp.ne.s32.totalorder %s241, %s244
    %p253 = scmp.eq.s32.totalorder %s26, 3
    %p254 = por %p252, %p253
    %p255 = scmp.ne.s32.totalorder %s244, %s245
    %p256 = scmp.eq.s32.totalorder %s26, 0
    %p257 = por %p255, %p256
    %p258 = scmp.ne.s32.totalorder %s244, %s245
    %p259 = scmp.eq.s32.totalorder %s27, 3
    %p260 = por %p258, %p259
    %p262 = scmp.ne.s32.totalorder %s245, %s261
    %p263 = scmp.eq.s32.totalorder %s27, 0
    %p264 = por %p262, %p263
    %s265 = ssub.s32 %s29, %s36
    %p266 = scmp.eq.s32.totalorder %s265, 0
    %s268 = sadd.s32 %s267, 1
    %s269 = scalar_select %p266, %s267, %s268
    %p272 = pneg %p266
    %p273 = scmp.eq.s32.totalorder %s21, 3
    %p274 = por %p272, %p273
    %p275 = scmp.ne.s32.totalorder %s267, %s270
    %p276 = scmp.eq.s32.totalorder %s21, 0
    %p277 = por %p275, %p276
    %p278 = scmp.ne.s32.totalorder %s267, %s270
    %p279 = scmp.eq.s32.totalorder %s26, 3
    %p280 = por %p278, %p279
    %p281 = scmp.ne.s32.totalorder %s270, %s271
    %p282 = scmp.eq.s32.totalorder %s26, 0
    %p283 = por %p281, %p282
    %p284 = scmp.ne.s32.totalorder %s270, %s271
    %p285 = scmp.eq.s32.totalorder %s27, 3
    %p286 = por %p284, %p285
    %p288 = scmp.ne.s32.totalorder %s271, %s287
    %p289 = scmp.eq.s32.totalorder %s27, 0
    %p290 = por %p288, %p289
    %s291 = ssub.s32 %s29, %s36
    %p292 = scmp.eq.s32.totalorder %s291, 0
    %s294 = sadd.s32 %s293, 1
    %s295 = scalar_select %p292, %s293, %s294
    %p298 = pneg %p292
    %p299 = scmp.eq.s32.totalorder %s21, 3
    %p300 = por %p298, %p299
    %p301 = scmp.ne.s32.totalorder %s293, %s296
    %p302 = scmp.eq.s32.totalorder %s21, 0
    %p303 = por %p301, %p302
    %p304 = scmp.ne.s32.totalorder %s293, %s296
    %p305 = scmp.eq.s32.totalorder %s26, 3
    %p306 = por %p304, %p305
    %p307 = scmp.ne.s32.totalorder %s296, %s297
    %p308 = scmp.eq.s32.totalorder %s26, 0
    %p309 = por %p307, %p308
    %p310 = scmp.ne.s32.totalorder %s296, %s297
    %p311 = scmp.eq.s32.totalorder %s27, 3
    %p312 = por %p310, %p311
    %p314 = scmp.ne.s32.totalorder %s297, %s313
    %p315 = scmp.eq.s32.totalorder %s27, 0
    %p316 = por %p314, %p315
    %s317 = ssub.s32 %s29, %s36
    %p318 = scmp.eq.s32.totalorder %s317, 0
    %s320 = sadd.s32 %s319, 1
    %s321 = scalar_select %p318, %s319, %s320
    %p324 = pneg %p318
    %p325 = scmp.eq.s32.totalorder %s21, 3
    %p326 = por %p324, %p325
    %p327 = scmp.ne.s32.totalorder %s319, %s322
    %p328 = scmp.eq.s32.totalorder %s21, 0
    %p329 = por %p327, %p328
    %p330 = scmp.ne.s32.totalorder %s319, %s322
    %p331 = scmp.eq.s32.totalorder %s26, 3
    %p332 = por %p330, %p331
    %p333 = scmp.ne.s32.totalorder %s322, %s323
    %p334 = scmp.eq.s32.totalorder %s26, 0
    %p335 = por %p333, %p334
    %p336 = scmp.ne.s32.totalorder %s322, %s323
    %p337 = scmp.eq.s32.totalorder %s27, 3
    %p338 = por %p336, %p337
    %p340 = scmp.ne.s32.totalorder %s323, %s339
    %p341 = scmp.eq.s32.totalorder %s27, 0
    %p342 = por %p340, %p341
    %s343 = ssub.s32 %s29, %s36
    %p344 = scmp.eq.s32.totalorder %s343, 0
    %s346 = sadd.s32 %s345, 1
    %s347 = scalar_select %p344, %s345, %s346
    %p350 = pneg %p344
    %p351 = scmp.eq.s32.totalorder %s21, 3
    %p352 = por %p350, %p351
    %p353 = scmp.ne.s32.totalorder %s345, %s348
    %p354 = scmp.eq.s32.totalorder %s21, 0
    %p355 = por %p353, %p354
    %p356 = scmp.ne.s32.totalorder %s345, %s348
    %p357 = scmp.eq.s32.totalorder %s26, 3
    %p358 = por %p356, %p357
    %p359 = scmp.ne.s32.totalorder %s348, %s349
    %p360 = scmp.eq.s32.totalorder %s26, 0
    %p361 = por %p359, %p360
    %p362 = scmp.ne.s32.totalorder %s348, %s349
    %p363 = scmp.eq.s32.totalorder %s27, 3
    %p364 = por %p362, %p363
    %p366 = scmp.ne.s32.totalorder %s349, %s365
    %p367 = scmp.eq.s32.totalorder %s27, 0
    %p368 = por %p366, %p367
    %s369 = ssub.s32 %s29, %s36
    %p370 = scmp.eq.s32.totalorder %s369, 0
    %s372 = sadd.s32 %s371, 1
    %s373 = scalar_select %p370, %s371, %s372
    %p376 = pneg %p370
    %p377 = scmp.eq.s32.totalorder %s21, 3
    %p378 = por %p376, %p377
    %p379 = scmp.ne.s32.totalorder %s371, %s374
    %p380 = scmp.eq.s32.totalorder %s21, 0
    %p381 = por %p379, %p380
    %p382 = scmp.ne.s32.totalorder %s371, %s374
    %p383 = scmp.eq.s32.totalorder %s26, 3
    %p384 = por %p382, %p383
    %p385 = scmp.ne.s32.totalorder %s374, %s375
    %p386 = scmp.eq.s32.totalorder %s26, 0
    %p387 = por %p385, %p386
    %p388 = scmp.ne.s32.totalorder %s374, %s375
    %p389 = scmp.eq.s32.totalorder %s27, 3
    %p390 = por %p388, %p389
    %p392 = scmp.ne.s32.totalorder %s375, %s391
    %p393 = scmp.eq.s32.totalorder %s27, 0
    %p394 = por %p392, %p393
    %s395 = ssub.s32 %s29, %s36
    %p396 = scmp.eq.s32.totalorder %s395, 0
    %s398 = sadd.s32 %s397, 1
    %s399 = scalar_select %p396, %s397, %s398
    %p402 = pneg %p396
    %p403 = scmp.eq.s32.totalorder %s21, 3
    %p404 = por %p402, %p403
    %p405 = scmp.ne.s32.totalorder %s397, %s400
    %p406 = scmp.eq.s32.totalorder %s21, 0
    %p407 = por %p405, %p406
    %p408 = scmp.ne.s32.totalorder %s397, %s400
    %p409 = scmp.eq.s32.totalorder %s26, 3
    %p410 = por %p408, %p409
    %p411 = scmp.ne.s32.totalorder %s400, %s401
    %p412 = scmp.eq.s32.totalorder %s26, 0
    %p413 = por %p411, %p412
    %p414 = scmp.ne.s32.totalorder %s400, %s401
    %p415 = scmp.eq.s32.totalorder %s27, 3
    %p416 = por %p414, %p415
    %p418 = scmp.ne.s32.totalorder %s401, %s417
    %p419 = scmp.eq.s32.totalorder %s27, 0
    %p420 = por %p418, %p419
    %s421 = ssub.s32 %s28, %s40
    %p422 = scmp.eq.s32.totalorder %s421, 0
    %s424 = sadd.s32 %s423, 1
    %s425 = scalar_select %p422, %s423, %s424
    %p428 = pneg %p422
    %p429 = scmp.eq.s32.totalorder %s21, 3
    %p430 = por %p428, %p429
    %p431 = scmp.ne.s32.totalorder %s423, %s426
    %p432 = scmp.eq.s32.totalorder %s21, 0
    %p433 = por %p431, %p432
    %p434 = scmp.ne.s32.totalorder %s423, %s426
    %p435 = scmp.eq.s32.totalorder %s26, 3
    %p436 = por %p434, %p435
    %p437 = scmp.ne.s32.totalorder %s426, %s427
    %p438 = scmp.eq.s32.totalorder %s26, 0
    %p439 = por %p437, %p438
    %p440 = scmp.ne.s32.totalorder %s426, %s427
    %p441 = scmp.eq.s32.totalorder %s27, 3
    %p442 = por %p440, %p441
    %p444 = scmp.ne.s32.totalorder %s427, %s443
    %p445 = scmp.eq.s32.totalorder %s27, 0
    %p446 = por %p444, %p445
    %p447 = scmp.le.s32.totalorder 1, %s21
    %p448 = scmp.lt.s32.totalorder %s21, 5
    %p449 = pnand %p447, %p448
    %p450 = pneg %p449
    // Predicated region
    $region9: #{font_classifier_forward.2} parent=5 // pred_check
      _
    $region10: #{font_classifier_forward.2} parent=5 // pred_check_branch
      %452 = sbr.rel (%p449) target = $region12
    $region11: #{font_classifier_forward.2} parent=5 // pred_region
      %s453 = ssub.s32 %s21, 1
      // Predicated region
      $region13: #{font_classifier_forward.2} parent=11 // pred_check
        %p454 = pneg %p80
      $region14: #{font_classifier_forward.2} parent=11 // pred_check_branch
        %456 = sbr.rel (%p454) target = $region16
      $region15: #{font_classifier_forward.2} parent=11 // pred_region
        _
      $region16: #{font_classifier_forward.2} parent=11 // pred_fallthru
        _
      // Predicated region
      $region17: #{font_classifier_forward.2} parent=11 // pred_check
        %p457 = pneg %p101
      $region18: #{font_classifier_forward.2} parent=11 // pred_check_branch
        %459 = sbr.rel (%p457) target = $region20
      $region19: #{font_classifier_forward.2} parent=11 // pred_region
        _
      $region20: #{font_classifier_forward.2} parent=11 // pred_fallthru
        _
    $region12: #{font_classifier_forward.2} parent=5 // pred_fallthru
      _
    %p460 = scmp.lt.s32.totalorder %s21, 4
    // Predicated region
    $region21: #{font_classifier_forward.2} parent=5 // pred_check
      %p461 = pneg %p460
    $region22: #{font_classifier_forward.2} parent=5 // pred_check_branch
      %463 = sbr.rel (%p461) target = $region24
    $region23: #{font_classifier_forward.2} parent=5 // pred_region
      // Predicated region
      $region25: #{font_classifier_forward.2} parent=23 // pred_check
        %p464 = pneg %p53
      $region26: #{font_classifier_forward.2} parent=23 // pred_check_branch
        %466 = sbr.rel (%p464) target = $region28
      $region27: #{font_classifier_forward.2} parent=23 // pred_region
        %p467 = scmp.lt.s32.totalorder %s28, 1
        %s468 = scalar_select %p467, %s28, 1
        %s469 = smul.addr %s468, 6
        %s470 = smul.addr %s469, 8
        %s471 = scalar_lea.vmem %s0, %s470
      $region28: #{font_classifier_forward.2} parent=23 // pred_fallthru
        _
      // Predicated region
      $region29: #{font_classifier_forward.2} parent=23 // pred_check
        %p472 = pneg %p121
      $region30: #{font_classifier_forward.2} parent=23 // pred_check_branch
        %474 = sbr.rel (%p472) target = $region32
      $region31: #{font_classifier_forward.2} parent=23 // pred_region
        %p475 = scmp.lt.s32.totalorder %s29, 1
        %s476 = scalar_select %p475, %s29, 1
        %s477 = scalar_lea.vmem %s3, %s476
      $region32: #{font_classifier_forward.2} parent=23 // pred_fallthru
        _
      // Predicated region
      $region33: #{font_classifier_forward.2} parent=23 // pred_check
        %p478 = pneg %p147
      $region34: #{font_classifier_forward.2} parent=23 // pred_check_branch
        %480 = sbr.rel (%p478) target = $region36
      $region35: #{font_classifier_forward.2} parent=23 // pred_region
        %p481 = scmp.lt.s32.totalorder %s29, 1
        %s482 = scalar_select %p481, %s29, 1
        %s483 = scalar_lea.vmem %s4, %s482
      $region36: #{font_classifier_forward.2} parent=23 // pred_fallthru
        _
      // Predicated region
      $region37: #{font_classifier_forward.2} parent=23 // pred_check
        %p484 = pneg %p173
      $region38: #{font_classifier_forward.2} parent=23 // pred_check_branch
        %486 = sbr.rel (%p484) target = $region40
      $region39: #{font_classifier_forward.2} parent=23 // pred_region
        %p487 = scmp.lt.s32.totalorder %s29, 1
        %s488 = scalar_select %p487, %s29, 1
        %s489 = smul.addr %s488, 96
        %s490 = smul.addr %s489, 4
        %s491 = scalar_lea.vmem %s5, %s490
      $region40: #{font_classifier_forward.2} parent=23 // pred_fallthru
        _
      // Predicated region
      $region41: #{font_classifier_forward.2} parent=23 // pred_check
        %p492 = pneg %p199
      $region42: #{font_classifier_forward.2} parent=23 // pred_check_branch
        %494 = sbr.rel (%p492) target = $region44
      $region43: #{font_classifier_forward.2} parent=23 // pred_region
        %p495 = scmp.lt.s32.totalorder %s29, 1
        %s496 = scalar_select %p495, %s29, 1
        %s497 = smul.addr %s496, 6
        %s498 = scalar_lea.vmem %s6, %s497
      $region44: #{font_classifier_forward.2} parent=23 // pred_fallthru
        _
      // Predicated region
      $region45: #{font_classifier_forward.2} parent=23 // pred_check
        %p499 = pneg %p225
      $region46: #{font_classifier_forward.2} parent=23 // pred_check_branch
        %501 = sbr.rel (%p499) target = $region48
      $region47: #{font_classifier_forward.2} parent=23 // pred_region
        %p502 = scmp.lt.s32.totalorder %s29, 1
        %s503 = scalar_select %p502, %s29, 1
        %s504 = smul.addr %s503, 32
        %s505 = smul.addr %s504, 4
        %s506 = scalar_lea.vmem %s7, %s505
      $region48: #{font_classifier_forward.2} parent=23 // pred_fallthru
        _
      // Predicated region
      $region49: #{font_classifier_forward.2} parent=23 // pred_check
        %p507 = pneg %p251
      $region50: #{font_classifier_forward.2} parent=23 // pred_check_branch
        %509 = sbr.rel (%p507) target = $region52
      $region51: #{font_classifier_forward.2} parent=23 // pred_region
        %p510 = scmp.lt.s32.totalorder %s29, 1
        %s511 = scalar_select %p510, %s29, 1
        %s512 = scalar_lea.vmem %s8, %s511
      $region52: #{font_classifier_forward.2} parent=23 // pred_fallthru
        _
      // Predicated region
      $region53: #{font_classifier_forward.2} parent=23 // pred_check
        %p513 = pneg %p277
      $region54: #{font_classifier_forward.2} parent=23 // pred_check_branch
        %515 = sbr.rel (%p513) target = $region56
      $region55: #{font_classifier_forward.2} parent=23 // pred_region
        %p516 = scmp.lt.s32.totalorder %s29, 1
        %s517 = scalar_select %p516, %s29, 1
        %s518 = scalar_lea.vmem %s9, %s517
      $region56: #{font_classifier_forward.2} parent=23 // pred_fallthru
        _
      // Predicated region
      $region57: #{font_classifier_forward.2} parent=23 // pred_check
        %p519 = pneg %p303
      $region58: #{font_classifier_forward.2} parent=23 // pred_check_branch
        %521 = sbr.rel (%p519) target = $region60
      $region59: #{font_classifier_forward.2} parent=23 // pred_region
        %p522 = scmp.lt.s32.totalorder %s29, 1
        %s523 = scalar_select %p522, %s29, 1
        %s524 = scalar_lea.vmem %s10, %s523
      $region60: #{font_classifier_forward.2} parent=23 // pred_fallthru
        _
      // Predicated region
      $region61: #{font_classifier_forward.2} parent=23 // pred_check
        %p525 = pneg %p329
      $region62: #{font_classifier_forward.2} parent=23 // pred_check_branch
        %527 = sbr.rel (%p525) target = $region64
      $region63: #{font_classifier_forward.2} parent=23 // pred_region
        %p528 = scmp.lt.s32.totalorder %s29, 1
        %s529 = scalar_select %p528, %s29, 1
        %s530 = smul.addr %s529, 32
        %s531 = smul.addr %s530, 4
        %s532 = scalar_lea.vmem %s11, %s531
      $region64: #{font_classifier_forward.2} parent=23 // pred_fallthru
        _
      // Predicated region
      $region65: #{font_classifier_forward.2} parent=23 // pred_check
        %p533 = pneg %p355
      $region66: #{font_classifier_forward.2} parent=23 // pred_check_branch
        %535 = sbr.rel (%p533) target = $region68
      $region67: #{font_classifier_forward.2} parent=23 // pred_region
        %p536 = scmp.lt.s32.totalorder %s29, 1
        %s537 = scalar_select %p536, %s29, 1
        %s538 = smul.addr %s537, 2
        %s539 = scalar_lea.vmem %s12, %s538
      $region68: #{font_classifier_forward.2} parent=23 // pred_fallthru
        _
      // Predicated region
      $region69: #{font_classifier_forward.2} parent=23 // pred_check
        %p540 = pneg %p381
      $region70: #{font_classifier_forward.2} parent=23 // pred_check_branch
        %542 = sbr.rel (%p540) target = $region72
      $region71: #{font_classifier_forward.2} parent=23 // pred_region
        %p543 = scmp.lt.s32.totalorder %s29, 1
        %s544 = scalar_select %p543, %s29, 1
        %s545 = smul.addr %s544, 32
        %s546 = smul.addr %s545, 4
        %s547 = scalar_lea.vmem %s13, %s546
      $region72: #{font_classifier_forward.2} parent=23 // pred_fallthru
        _
      // Predicated region
      $region73: #{font_classifier_forward.2} parent=23 // pred_check
        %p548 = pneg %p407
      $region74: #{font_classifier_forward.2} parent=23 // pred_check_branch
        %550 = sbr.rel (%p548) target = $region76
      $region75: #{font_classifier_forward.2} parent=23 // pred_region
        %p551 = scmp.lt.s32.totalorder %s29, 1
        %s552 = scalar_select %p551, %s29, 1
        %s553 = scalar_lea.vmem %s14, %s552
      $region76: #{font_classifier_forward.2} parent=23 // pred_fallthru
        _
    $region24: #{font_classifier_forward.2} parent=5 // pred_fallthru
      _
    %p554 = scmp.le.s32.totalorder 1, %s21
    %p555 = scmp.lt.s32.totalorder %s21, 5
    %p556 = pnand %p554, %p555
    %p557 = pneg %p556
    // Predicated region
    $region77: #{font_classifier_forward.2} parent=5 // pred_check
      _
    $region78: #{font_classifier_forward.2} parent=5 // pred_check_branch
      %559 = sbr.rel (%p556) target = $region80
    $region79: #{font_classifier_forward.2} parent=5 // pred_region
      %s560 = ssub.s32 %s21, 1
      %p561 = scmp.lt.s32.totalorder %s30, 1
      %s562 = scalar_select %p561, %s30, 1
      %s563 = smul.addr %s562, 6
      %s564 = smul.addr %s563, 8
      %s565 = scalar_lea.vmem %s0, %s564
      %p566 = pneg %p59
      %p567 = pneg %p56
      %p568 = pneg %p80
      %p569 = pneg %p77
      %p570 = pneg %p101
      %p571 = pneg %p98
      %p572 = scmp.lt.s32.totalorder %s31, 1
      %s573 = scalar_select %p572, %s31, 1
      %s574 = scalar_lea.vmem %s3, %s573
      %p575 = pneg %p127
      %p576 = pneg %p124
      %p577 = scmp.lt.s32.totalorder %s31, 1
      %s578 = scalar_select %p577, %s31, 1
      %s579 = scalar_lea.vmem %s4, %s578
      %p580 = pneg %p153
      %p581 = pneg %p150
      %p582 = scmp.lt.s32.totalorder %s31, 1
      %s583 = scalar_select %p582, %s31, 1
      %s584 = smul.addr %s583, 96
      %s585 = smul.addr %s584, 4
      %s586 = scalar_lea.vmem %s5, %s585
      %p587 = pneg %p179
      %p588 = pneg %p176
      %p589 = scmp.lt.s32.totalorder %s31, 1
      %s590 = scalar_select %p589, %s31, 1
      %s591 = smul.addr %s590, 6
      %s592 = scalar_lea.vmem %s6, %s591
      %p593 = pneg %p205
      %p594 = pneg %p202
      %p595 = scmp.lt.s32.totalorder %s31, 1
      %s596 = scalar_select %p595, %s31, 1
      %s597 = smul.addr %s596, 32
      %s598 = smul.addr %s597, 4
      %s599 = scalar_lea.vmem %s7, %s598
      %p600 = pneg %p231
      %p601 = pneg %p228
      %p602 = scmp.lt.s32.totalorder %s31, 1
      %s603 = scalar_select %p602, %s31, 1
      %s604 = scalar_lea.vmem %s8, %s603
      %p605 = pneg %p257
      %p606 = pneg %p254
      %p607 = scmp.lt.s32.totalorder %s31, 1
      %s608 = scalar_select %p607, %s31, 1
      %s609 = scalar_lea.vmem %s9, %s608
      %p610 = pneg %p283
      %p611 = pneg %p280
      %p612 = scmp.lt.s32.totalorder %s31, 1
      %s613 = scalar_select %p612, %s31, 1
      %s614 = scalar_lea.vmem %s10, %s613
      %p615 = pneg %p309
      %p616 = pneg %p306
      %p617 = scmp.lt.s32.totalorder %s31, 1
      %s618 = scalar_select %p617, %s31, 1
      %s619 = smul.addr %s618, 32
      %s620 = smul.addr %s619, 4
      %s621 = scalar_lea.vmem %s11, %s620
      %p622 = pneg %p335
      %p623 = pneg %p332
      %p624 = scmp.lt.s32.totalorder %s31, 1
      %s625 = scalar_select %p624, %s31, 1
      %s626 = smul.addr %s625, 2
      %s627 = scalar_lea.vmem %s12, %s626
      %p628 = pneg %p361
      %p629 = pneg %p358
      %p630 = scmp.lt.s32.totalorder %s31, 1
      %s631 = scalar_select %p630, %s31, 1
      %s632 = smul.addr %s631, 32
      %s633 = smul.addr %s632, 4
      %s634 = scalar_lea.vmem %s13, %s633
      %p635 = pneg %p387
      %p636 = pneg %p384
      %p637 = scmp.lt.s32.totalorder %s31, 1
      %s638 = scalar_select %p637, %s31, 1
      %s639 = scalar_lea.vmem %s14, %s638
      %p640 = pneg %p413
      %p641 = pneg %p410
      %p642 = pneg %p439
      %p643 = pneg %p436
      %p644 = scmp.lt.s32.totalorder %s30, 1
      %s645 = scalar_select %p644, %s30, 1
      %s646 = smul.addr %s645, 3
      %s647 = smul.addr %s646, 8
      %s648 = scalar_lea.vmem %s15, %s647
      %p649 = scmp.lt.s32.totalorder %s30, 1
      %s650 = scalar_select %p649, %s30, 1
      %s651 = smul.addr %s650, 6
      %s652 = smul.addr %s651, 8
      %s653 = scalar_lea.vmem %s0, %s652
      %p654 = scmp.lt.s32.totalorder %s31, 1
      %s655 = scalar_select %p654, %s31, 1
      %s656 = scalar_lea.vmem %s3, %s655
      %p657 = scmp.lt.s32.totalorder %s31, 1
      %s658 = scalar_select %p657, %s31, 1
      %s659 = scalar_lea.vmem %s4, %s658
      %p660 = scmp.lt.s32.totalorder %s31, 1
      %s661 = scalar_select %p660, %s31, 1
      %s662 = smul.addr %s661, 96
      %s663 = smul.addr %s662, 4
      %s664 = scalar_lea.vmem %s5, %s663
      %p665 = scmp.lt.s32.totalorder %s31, 1
      %s666 = scalar_select %p665, %s31, 1
      %s667 = smul.addr %s666, 6
      %s668 = scalar_lea.vmem %s6, %s667
      %p669 = scmp.lt.s32.totalorder %s31, 1
      %s670 = scalar_select %p669, %s31, 1
      %s671 = smul.addr %s670, 32
      %s672 = smul.addr %s671, 4
      %s673 = scalar_lea.vmem %s7, %s672
      %p674 = scmp.lt.s32.totalorder %s31, 1
      %s675 = scalar_select %p674, %s31, 1
      %s676 = scalar_lea.vmem %s8, %s675
      %p677 = scmp.lt.s32.totalorder %s31, 1
      %s678 = scalar_select %p677, %s31, 1
      %s679 = scalar_lea.vmem %s9, %s678
      %p680 = scmp.lt.s32.totalorder %s31, 1
      %s681 = scalar_select %p680, %s31, 1
      %s682 = scalar_lea.vmem %s10, %s681
      %p683 = scmp.lt.s32.totalorder %s31, 1
      %s684 = scalar_select %p683, %s31, 1
      %s685 = smul.addr %s684, 32
      %s686 = smul.addr %s685, 4
      %s687 = scalar_lea.vmem %s11, %s686
      %p688 = scmp.lt.s32.totalorder %s31, 1
      %s689 = scalar_select %p688, %s31, 1
      %s690 = smul.addr %s689, 2
      %s691 = scalar_lea.vmem %s12, %s690
      %p692 = scmp.lt.s32.totalorder %s31, 1
      %s693 = scalar_select %p692, %s31, 1
      %s694 = smul.addr %s693, 32
      %s695 = smul.addr %s694, 4
      %s696 = scalar_lea.vmem %s13, %s695
      %p697 = scmp.lt.s32.totalorder %s31, 1
      %s698 = scalar_select %p697, %s31, 1
      %s699 = scalar_lea.vmem %s14, %s698
      %p700 = scmp.lt.s32.totalorder %s30, 1
      %s701 = scalar_select %p700, %s30, 1
      %s702 = smul.addr %s701, 3
      %s703 = smul.addr %s702, 8
      %s704 = scalar_lea.vmem %s15, %s703
      %p706 = scmp.eq.s32.totalorder %s31, 0
      // Predicated region
      $region81: #{font_classifier_forward.2} parent=79 // pred_check
        %p707 = pneg %p706
      $region82: #{font_classifier_forward.2} parent=79 // pred_check_branch
        %709 = sbr.rel (%p707) target = $region84
      $region83: #{font_classifier_forward.2} parent=79 // pred_region
        %v710 = vld [vmem:[%s653] sm:$0xff]
        %v711 = vld [vmem:[%s653 + $0x8] sm:$0xff]
        %v712 = vld [vmem:[%s653 + $0x10] sm:$0xff]
        %v713 = vld [vmem:[%s653 + $0x18] sm:$0xff]
        %v714 = vld [vmem:[%s653 + $0x20] sm:$0xff]
        %v715 = vld [vmem:[%s653 + $0x28] sm:$0xff]
        %v716 = vpack.c.bf16 %v712, %v710
        %v717 = vpack.c.bf16 %v713, %v711
        %v718 = vpack.c.bf16 %v714, %v714
        %v719 = vpack.c.bf16 %v715, %v715
        %v720 = vld [vmem:[%s1] sm:$0xf]
        %v721 = vld [vmem:[%s1 + $0x4] sm:$0xf]
        %v722 = vld [vmem:[%s1 + $0x8] sm:$0xf]
        %v723 = vld [vmem:[%s1 + $0xc] sm:$0xf]
        %v724 = vld [vmem:[%s1 + $0x10] sm:$0xf]
        %v725 = vld [vmem:[%s1 + $0x14] sm:$0xf]
        %v726 = vld [vmem:[%s1 + $0x18] sm:$0xf]
        %v727 = vld [vmem:[%s1 + $0x1c] sm:$0xf]
        %v728 = vld [vmem:[%s1 + $0x20] sm:$0xf]
        %v729 = vld [vmem:[%s1 + $0x24] sm:$0xf]
        %v730 = vld [vmem:[%s1 + $0x28] sm:$0xf]
        %v731 = vld [vmem:[%s1 + $0x2c] sm:$0xf]
        %v732 = vld [vmem:[%s1 + $0x30] sm:$0xf]
        %v733 = vld [vmem:[%s1 + $0x34] sm:$0xf]
        %v734 = vld [vmem:[%s1 + $0x38] sm:$0xf]
        %v735 = vld [vmem:[%s1 + $0x3c] sm:$0xf]
        %v736 = vld [vmem:[%s1 + $0x40] sm:$0xf]
        %v737 = vld [vmem:[%s1 + $0x44] sm:$0xf]
        %v738 = vld [vmem:[%s1 + $0x48] sm:$0xf]
        %v739 = vld [vmem:[%s1 + $0x4c] sm:$0xf]
        %v740 = vld [vmem:[%s1 + $0x50] sm:$0xf]
        %v741 = vld [vmem:[%s1 + $0x54] sm:$0xf]
        %v742 = vld [vmem:[%s1 + $0x58] sm:$0xf]
        %v743 = vld [vmem:[%s1 + $0x5c] sm:$0xf]
        %v744 = vld [vmem:[%s2] sm:$0xff]
        %v745 = vld [vmem:[%s2 + $0x8] sm:$0xff]
        %v746 = vld [vmem:[%s2 + $0x10] sm:$0xff]
        %v771 = vunpack.c.l.b16 %v720
        %v772 = vunpack.c.l.b16 %v721
        %v773 = vunpack.c.l.b16 %v722
        %v774 = vunpack.c.l.b16 %v723
        %v775 = vunpack.c.l.b16 %v724
        %v776 = vunpack.c.l.b16 %v725
        %v777 = vunpack.c.l.b16 %v726
        %v778 = vunpack.c.l.b16 %v727
        %v779 = vunpack.c.l.b16 %v728
        %v780 = vunpack.c.l.b16 %v729
        %v781 = vunpack.c.l.b16 %v730
        %v782 = vunpack.c.l.b16 %v731
        %v783 = vunpack.c.l.b16 %v732
        %v784 = vunpack.c.l.b16 %v733
        %v785 = vunpack.c.l.b16 %v734
        %v786 = vunpack.c.l.b16 %v735
        %v787 = vunpack.c.l.b16 %v736
        %v788 = vunpack.c.l.b16 %v737
        %v789 = vunpack.c.l.b16 %v738
        %v790 = vunpack.c.l.b16 %v739
        %v791 = vunpack.c.l.b16 %v740
        %v792 = vunpack.c.l.b16 %v741
        %v793 = vunpack.c.l.b16 %v742
        %v794 = vunpack.c.l.b16 %v743
        %v795 = vpack.c.b16 %v772, %v771
        %v796 = vpack.c.b16 %v774, %v773
        %v797 = vpack.c.b16 %v776, %v775
        %v798 = vpack.c.b16 %v778, %v777
        %v799 = vpack.c.b16 %v780, %v779
        %v800 = vpack.c.b16 %v782, %v781
        %v801 = vpack.c.b16 %v784, %v783
        %v802 = vpack.c.b16 %v786, %v785
        %v803 = vpack.c.b16 %v788, %v787
        %v804 = vpack.c.b16 %v790, %v789
        %v805 = vpack.c.b16 %v792, %v791
        %v806 = vpack.c.b16 %v794, %v793
        %vm819 = vcmask 523264
        %v821 = vsel %vm819, %v717, 0
        %v824 = vsel %vm819, %v719, 0
        %826 = vmatprep.subr.bf16.mxu0 0
        %827 = vmatpush1.bf16.msra.mxu0 %v802
        %828 = vmatprep.subr.bf16.mxu0 0
        %829 = vmatpush1.bf16.msra.mxu0 %v801
        %830 = vmatprep.subr.bf16.mxu0 0
        %831 = vmatpush1.bf16.msra.mxu0 %v800
        %832 = vmatprep.subr.bf16.mxu0 0
        %833 = vmatpush1.bf16.msra.mxu0 %v799
        %834 = vmatprep.subr.bf16.mxu0 0
        %835 = vmatpush1.bf16.msra.mxu0 %v798
        %836 = vmatprep.subr.bf16.mxu0 0
        %837 = vmatpush1.bf16.msra.mxu0 %v797
        %838 = vmatprep.subr.bf16.mxu0 0
        %839 = vmatpush1.bf16.msra.mxu0 %v796
        %840 = vmatprep.subr.bf16.mxu0 0
        %841 = vmatpush1.bf16.msra.mxu0 %v795
        %842 = vmatprep.subr.bf16.mxu0 0
        %843 = vmatpush2.bf16.msra.mxu0 0
        %844 = vmatprep.subr.bf16.mxu0 0
        %845 = vmatpush2.bf16.msra.mxu0 0
        %846 = vmatprep.subr.bf16.mxu0 0
        %847 = vmatpush2.bf16.msra.mxu0 0
        %848 = vmatprep.subr.bf16.mxu0 0
        %849 = vmatpush2.bf16.msra.mxu0 0
        %850 = vmatprep.subr.bf16.mxu0 0
        %851 = vmatpush2.bf16.msra.mxu0 %v806
        %852 = vmatprep.subr.bf16.mxu0 0
        %853 = vmatpush2.bf16.msra.mxu0 %v805
        %854 = vmatprep.subr.bf16.mxu0 0
        %855 = vmatpush2.bf16.msra.mxu0 %v804
        %856 = vmatprep.subr.bf16.mxu0 0
        %857 = vmatpush2.bf16.msra.mxu0 %v803
        %858 = vmatprep.mubr.bf16.mxu0 %v821
        %859 = vmatmul.mubr.bf16.gmra.mxu0 %v716
        %v860 = vpop.f32.mrf.mxu0
        %v861 = vadd.f32 %v744, %v860
        %v862 = vpop.f32.mrf.mxu0
        %v863 = vpop.f32.mrf.mxu0
        %v864 = vadd.f32 %v745, %v863
        %v865 = vpop.f32.mrf.mxu0
        %866 = vmatprep.mubr.bf16.mxu0 %v824
        %867 = vmatmul.mubr.bf16.gmra.mxu0 %v718
        %v868 = vpop.f32.mrf.mxu0
        %v869 = vadd.f32 %v746, %v868
        %v870 = vpop.f32.mrf.mxu0
        %v871 = vpop.f32.mrf.mxu0
        %v872 = vpop.f32.mrf.mxu0
        %873 = vdwg.mxu0
        %874 = vst [vmem:[%s704] sm:$0xff] %v861
        %875 = vst [vmem:[%s704 + $0x8] sm:$0xff] %v864
        %876 = vst [vmem:[%s704 + $0x10] sm:$0xff] %v869
      $region84: #{font_classifier_forward.2} parent=79 // pred_fallthru
        _
      %v877 = vld [vmem:[%s704] sm:$0xff]
      %v878 = vld [vmem:[%s704 + $0x8] sm:$0xff]
      %v879 = vld [vmem:[%s704 + $0x10] sm:$0xff]
      %880 = vadd.xlane.f32.xlu0 %v877
      %v881 = vpop.xlane.xlu0 %880
      %882 = vadd.xlane.f32.xlu0 %v878
      %v883 = vpop.xlane.xlu0 %882
      %884 = vadd.xlane.f32.xlu0 %v879
      %v885 = vpop.xlane.xlu0 %884
      %v886 = vrcp.pop 128.0
      %v887 = vmul.f32 %v881, %v886
      %v888 = vmul.f32 %v883, %v886
      %v889 = vmul.f32 %v885, %v886
      %v890 = vsub.f32 %v877, %v887
      %v891 = vsub.f32 %v878, %v888
      %v892 = vsub.f32 %v879, %v889
      %v893 = vmul.f32 %v890, %v890
      %v894 = vmul.f32 %v891, %v891
      %v895 = vmul.f32 %v892, %v892
      %896 = vadd.xlane.f32.xlu0 %v893
      %v897 = vpop.xlane.xlu0 %896
      %898 = vadd.xlane.f32.xlu0 %v894
      %v899 = vpop.xlane.xlu0 %898
      %900 = vadd.xlane.f32.xlu0 %v895
      %v901 = vpop.xlane.xlu0 %900
      %v902 = vmul.f32 %v897, %v886
      %v903 = vmul.f32 %v899, %v886
      %v904 = vmul.f32 %v901, %v886
      %v905 = vadd.f32 %v902, 1e-06
      %v906 = vadd.f32 %v903, 1e-06
      %v907 = vadd.f32 %v904, 1e-06
      %v908 = vrsqrt.pop %v905
      %v909 = vrsqrt.pop %v906
      %v910 = vrsqrt.pop %v907
      %v911 = vmul.f32 %v890, %v908
      %v912 = vmul.f32 %v891, %v909
      %v913 = vmul.f32 %v892, %v910
      %v914 = vld [vmem:[%s656] sm:$0x1]
      %v916 = vlaneseq
      %v917 = vshrl.u32 %v916, 7
      %v918 = vsub.s32 0, %v917
      %v919 = vrot.slane %v914, %v918
      %v921 = vmul.f32 %v911, %v919
      %v922 = vmul.f32 %v912, %v919
      %v923 = vmul.f32 %v913, %v919
      %v924 = vld [vmem:[%s659] sm:$0x1]
      %v926 = vlaneseq
      %v927 = vshrl.u32 %v926, 7
      %v928 = vsub.s32 0, %v927
      %v929 = vrot.slane %v924, %v928
      %v931 = vadd.f32 %v921, %v929
      %v932 = vadd.f32 %v922, %v929
      %v933 = vadd.f32 %v923, %v929
      %v934 = vpack.c.bf16 %v932, %v931
      %v935 = vpack.c.bf16 %v933, %v933
      %v936 = vld [vmem:[%s664] sm:$0xff]
      %v937 = vld [vmem:[%s664 + $0x8] sm:$0xff]
      %v938 = vld [vmem:[%s664 + $0x10] sm:$0xff]
      %v939 = vld [vmem:[%s664 + $0x18] sm:$0xff]
      %v940 = vld [vmem:[%s664 + $0x20] sm:$0xff]
      %v941 = vld [vmem:[%s664 + $0x28] sm:$0xff]
      %v942 = vld [vmem:[%s664 + $0x30] sm:$0xff]
      %v943 = vld [vmem:[%s664 + $0x38] sm:$0xff]
      %v944 = vld [vmem:[%s664 + $0x40] sm:$0xff]
      %v945 = vld [vmem:[%s664 + $0x48] sm:$0xff]
      %v946 = vld [vmem:[%s664 + $0x50] sm:$0xff]
      %v947 = vld [vmem:[%s664 + $0x58] sm:$0xff]
      %v948 = vld [vmem:[%s664 + $0x60] sm:$0xff]
      %v949 = vld [vmem:[%s664 + $0x68] sm:$0xff]
      %v950 = vld [vmem:[%s664 + $0x70] sm:$0xff]
      %v951 = vld [vmem:[%s664 + $0x78] sm:$0xff]
      %v952 = vld [vmem:[%s664 + $0x80] sm:$0xff]
      %v953 = vld [vmem:[%s664 + $0x88] sm:$0xff]
      %v954 = vld [vmem:[%s664 + $0x90] sm:$0xff]
      %v955 = vld [vmem:[%s664 + $0x98] sm:$0xff]
      %v956 = vld [vmem:[%s664 + $0xa0] sm:$0xff]
      %v957 = vld [vmem:[%s664 + $0xa8] sm:$0xff]
      %v958 = vld [vmem:[%s664 + $0xb0] sm:$0xff]
      %v959 = vld [vmem:[%s664 + $0xb8] sm:$0xff]
      %v960 = vld [vmem:[%s664 + $0xc0] sm:$0xff]
      %v961 = vld [vmem:[%s664 + $0xc8] sm:$0xff]
      %v962 = vld [vmem:[%s664 + $0xd0] sm:$0xff]
      %v963 = vld [vmem:[%s664 + $0xd8] sm:$0xff]
      %v964 = vld [vmem:[%s664 + $0xe0] sm:$0xff]
      %v965 = vld [vmem:[%s664 + $0xe8] sm:$0xff]
      %v966 = vld [vmem:[%s664 + $0xf0] sm:$0xff]
      %v967 = vld [vmem:[%s664 + $0xf8] sm:$0xff]
      %v968 = vld [vmem:[%s664 + $0x100] sm:$0xff]
      %v969 = vld [vmem:[%s664 + $0x108] sm:$0xff]
      %v970 = vld [vmem:[%s664 + $0x110] sm:$0xff]
      %v971 = vld [vmem:[%s664 + $0x118] sm:$0xff]
      %v972 = vld [vmem:[%s664 + $0x120] sm:$0xff]
      %v973 = vld [vmem:[%s664 + $0x128] sm:$0xff]
      %v974 = vld [vmem:[%s664 + $0x130] sm:$0xff]
      %v975 = vld [vmem:[%s664 + $0x138] sm:$0xff]
      %v976 = vld [vmem:[%s664 + $0x140] sm:$0xff]
      %v977 = vld [vmem:[%s664 + $0x148] sm:$0xff]
      %v978 = vld [vmem:[%s664 + $0x150] sm:$0xff]
      %v979 = vld [vmem:[%s664 + $0x158] sm:$0xff]
      %v980 = vld [vmem:[%s664 + $0x160] sm:$0xff]
      %v981 = vld [vmem:[%s664 + $0x168] sm:$0xff]
      %v982 = vld [vmem:[%s664 + $0x170] sm:$0xff]
      %v983 = vld [vmem:[%s664 + $0x178] sm:$0xff]
      %v984 = vld [vmem:[%s668] sm:$0x3f]
      %v986 = vlaneseq
      %v987 = vshrl.u32 %v986, 7
      %v988 = vsub.s32 0, %v987
      %v989 = vrot.slane %v984, %v988
      %v990 = vlaneseq
      %v991 = vshrl.u32 %v990, 7
      %v992 = vsub.s32 1, %v991
      %v993 = vrot.slane %v984, %v992
      %v994 = vlaneseq
      %v995 = vshrl.u32 %v994, 7
      %v996 = vsub.s32 2, %v995
      %v997 = vrot.slane %v984, %v996
      %v998 = vlaneseq
      %v999 = vshrl.u32 %v998, 7
      %v1000 = vsub.s32 3, %v999
      %v1001 = vrot.slane %v984, %v1000
      %v1002 = vlaneseq
      %v1003 = vshrl.u32 %v1002, 7
      %v1004 = vsub.s32 4, %v1003
      %v1005 = vrot.slane %v984, %v1004
      %v1006 = vlaneseq
      %v1007 = vshrl.u32 %v1006, 7
      %v1008 = vsub.s32 5, %v1007
      %v1009 = vrot.slane %v984, %v1008
      %v1064 = vunpack.c.l.b16 %v936
      %v1065 = vunpack.c.h.b16 %v936
      %v1066 = vunpack.c.l.b16 %v937
      %v1067 = vunpack.c.h.b16 %v937
      %v1068 = vunpack.c.l.b16 %v938
      %v1069 = vunpack.c.h.b16 %v938
      %v1070 = vunpack.c.l.b16 %v939
      %v1071 = vunpack.c.h.b16 %v939
      %v1072 = vunpack.c.l.b16 %v940
      %v1073 = vunpack.c.h.b16 %v940
      %v1074 = vunpack.c.l.b16 %v941
      %v1075 = vunpack.c.h.b16 %v941
      %v1076 = vunpack.c.l.b16 %v942
      %v1077 = vunpack.c.h.b16 %v942
      %v1078 = vunpack.c.l.b16 %v943
      %v1079 = vunpack.c.h.b16 %v943
      %v1080 = vunpack.c.l.b16 %v944
      %v1081 = vunpack.c.h.b16 %v944
      %v1082 = vunpack.c.l.b16 %v945
      %v1083 = vunpack.c.h.b16 %v945
      %v1084 = vunpack.c.l.b16 %v946
      %v1085 = vunpack.c.h.b16 %v946
      %v1086 = vunpack.c.l.b16 %v947
      %v1087 = vunpack.c.h.b16 %v947
      %v1088 = vunpack.c.l.b16 %v948
      %v1089 = vunpack.c.h.b16 %v948
      %v1090 = vunpack.c.l.b16 %v949
      %v1091 = vunpack.c.h.b16 %v949
      %v1092 = vunpack.c.l.b16 %v950
      %v1093 = vunpack.c.h.b16 %v950
      %v1094 = vunpack.c.l.b16 %v951
      %v1095 = vunpack.c.h.b16 %v951
      %v1096 = vunpack.c.l.b16 %v952
      %v1097 = vunpack.c.h.b16 %v952
      %v1098 = vunpack.c.l.b16 %v953
      %v1099 = vunpack.c.h.b16 %v953
      %v1100 = vunpack.c.l.b16 %v954
      %v1101 = vunpack.c.h.b16 %v954
      %v1102 = vunpack.c.l.b16 %v955
      %v1103 = vunpack.c.h.b16 %v955
      %v1104 = vunpack.c.l.b16 %v956
      %v1105 = vunpack.c.h.b16 %v956
      %v1106 = vunpack.c.l.b16 %v957
      %v1107 = vunpack.c.h.b16 %v957
      %v1108 = vunpack.c.l.b16 %v958
      %v1109 = vunpack.c.h.b16 %v958
      %v1110 = vunpack.c.l.b16 %v959
      %v1111 = vunpack.c.h.b16 %v959
      %v1112 = vunpack.c.l.b16 %v960
      %v1113 = vunpack.c.h.b16 %v960
      %v1114 = vunpack.c.l.b16 %v961
      %v1115 = vunpack.c.h.b16 %v961
      %v1116 = vunpack.c.l.b16 %v962
      %v1117 = vunpack.c.h.b16 %v962
      %v1118 = vunpack.c.l.b16 %v963
      %v1119 = vunpack.c.h.b16 %v963
      %v1120 = vunpack.c.l.b16 %v964
      %v1121 = vunpack.c.h.b16 %v964
      %v1122 = vunpack.c.l.b16 %v965
      %v1123 = vunpack.c.h.b16 %v965
      %v1124 = vunpack.c.l.b16 %v966
      %v1125 = vunpack.c.h.b16 %v966
      %v1126 = vunpack.c.l.b16 %v967
      %v1127 = vunpack.c.h.b16 %v967
      %v1128 = vunpack.c.l.b16 %v968
      %v1129 = vunpack.c.h.b16 %v968
      %v1130 = vunpack.c.l.b16 %v969
      %v1131 = vunpack.c.h.b16 %v969
      %v1132 = vunpack.c.l.b16 %v970
      %v1133 = vunpack.c.h.b16 %v970
      %v1134 = vunpack.c.l.b16 %v971
      %v1135 = vunpack.c.h.b16 %v971
      %v1136 = vunpack.c.l.b16 %v972
      %v1137 = vunpack.c.h.b16 %v972
      %v1138 = vunpack.c.l.b16 %v973
      %v1139 = vunpack.c.h.b16 %v973
      %v1140 = vunpack.c.l.b16 %v974
      %v1141 = vunpack.c.h.b16 %v974
      %v1142 = vunpack.c.l.b16 %v975
      %v1143 = vunpack.c.h.b16 %v975
      %v1144 = vunpack.c.l.b16 %v976
      %v1145 = vunpack.c.h.b16 %v976
      %v1146 = vunpack.c.l.b16 %v977
      %v1147 = vunpack.c.h.b16 %v977
      %v1148 = vunpack.c.l.b16 %v978
      %v1149 = vunpack.c.h.b16 %v978
      %v1150 = vunpack.c.l.b16 %v979
      %v1151 = vunpack.c.h.b16 %v979
      %v1152 = vunpack.c.l.b16 %v980
      %v1153 = vunpack.c.h.b16 %v980
      %v1154 = vunpack.c.l.b16 %v981
      %v1155 = vunpack.c.h.b16 %v981
      %v1156 = vunpack.c.l.b16 %v982
      %v1157 = vunpack.c.h.b16 %v982
      %v1158 = vunpack.c.l.b16 %v983
      %v1159 = vunpack.c.h.b16 %v983
      %v1160 = vpack.c.b16 %v1070, %v1064
      %v1161 = vpack.c.b16 %v1071, %v1065
      %v1162 = vpack.c.b16 %v1072, %v1066
      %v1163 = vpack.c.b16 %v1073, %v1067
      %v1164 = vpack.c.b16 %v1074, %v1068
      %v1165 = vpack.c.b16 %v1075, %v1069
      %v1166 = vpack.c.b16 %v1082, %v1076
      %v1167 = vpack.c.b16 %v1083, %v1077
      %v1168 = vpack.c.b16 %v1084, %v1078
      %v1169 = vpack.c.b16 %v1085, %v1079
      %v1170 = vpack.c.b16 %v1086, %v1080
      %v1171 = vpack.c.b16 %v1087, %v1081
      %v1172 = vpack.c.b16 %v1094, %v1088
      %v1173 = vpack.c.b16 %v1095, %v1089
      %v1174 = vpack.c.b16 %v1096, %v1090
      %v1175 = vpack.c.b16 %v1097, %v1091
      %v1176 = vpack.c.b16 %v1098, %v1092
      %v1177 = vpack.c.b16 %v1099, %v1093
      %v1178 = vpack.c.b16 %v1106, %v1100
      %v1179 = vpack.c.b16 %v1107, %v1101
      %v1180 = vpack.c.b16 %v1108, %v1102
      %v1181 = vpack.c.b16 %v1109, %v1103
      %v1182 = vpack.c.b16 %v1110, %v1104
      %v1183 = vpack.c.b16 %v1111, %v1105
      %v1184 = vpack.c.b16 %v1118, %v1112
      %v1185 = vpack.c.b16 %v1119, %v1113
      %v1186 = vpack.c.b16 %v1120, %v1114
      %v1187 = vpack.c.b16 %v1121, %v1115
      %v1188 = vpack.c.b16 %v1122, %v1116
      %v1189 = vpack.c.b16 %v1123, %v1117
      %v1190 = vpack.c.b16 %v1130, %v1124
      %v1191 = vpack.c.b16 %v1131, %v1125
      %v1192 = vpack.c.b16 %v1132, %v1126
      %v1193 = vpack.c.b16 %v1133, %v1127
      %v1194 = vpack.c.b16 %v1134, %v1128
      %v1195 = vpack.c.b16 %v1135, %v1129
      %v1196 = vpack.c.b16 %v1142, %v1136
      %v1197 = vpack.c.b16 %v1143, %v1137
      %v1198 = vpack.c.b16 %v1144, %v1138
      %v1199 = vpack.c.b16 %v1145, %v1139
      %v1200 = vpack.c.b16 %v1146, %v1140
      %v1201 = vpack.c.b16 %v1147, %v1141
      %v1202 = vpack.c.b16 %v1154, %v1148
      %v1203 = vpack.c.b16 %v1155, %v1149
      %v1204 = vpack.c.b16 %v1156, %v1150
      %v1205 = vpack.c.b16 %v1157, %v1151
      %v1206 = vpack.c.b16 %v1158, %v1152
      %v1207 = vpack.c.b16 %v1159, %v1153
      %1256 = vmatprep.subr.bf16.mxu0 %v1203
      %1257 = vmatpush1.bf16.msra.mxu0 %v1202
      %1258 = vmatprep.subr.bf16.mxu0 %v1197
      %1259 = vmatpush1.bf16.msra.mxu0 %v1196
      %1260 = vmatprep.subr.bf16.mxu0 %v1191
      %1261 = vmatpush1.bf16.msra.mxu0 %v1190
      %1262 = vmatprep.subr.bf16.mxu0 %v1185
      %1263 = vmatpush1.bf16.msra.mxu0 %v1184
      %1264 = vmatprep.subr.bf16.mxu0 %v1179
      %1265 = vmatpush1.bf16.msra.mxu0 %v1178
      %1266 = vmatprep.subr.bf16.mxu0 %v1173
      %1267 = vmatpush1.bf16.msra.mxu0 %v1172
      %1268 = vmatprep.subr.bf16.mxu0 %v1167
      %1269 = vmatpush1.bf16.msra.mxu0 %v1166
      %1270 = vmatprep.subr.bf16.mxu0 %v1161
      %1271 = vmatpush1.bf16.msra.mxu0 %v1160
      %1272 = vmatprep.subr.bf16.mxu0 0
      %1273 = vmatpush2.bf16.msra.mxu0 0
      %1274 = vmatprep.subr.bf16.mxu0 0
      %1275 = vmatpush2.bf16.msra.mxu0 0
      %1276 = vmatprep.subr.bf16.mxu0 0
      %1277 = vmatpush2.bf16.msra.mxu0 0
      %1278 = vmatprep.subr.bf16.mxu0 0
      %1279 = vmatpush2.bf16.msra.mxu0 0
      %1280 = vmatprep.subr.bf16.mxu0 0
      %1281 = vmatpush2.bf16.msra.mxu0 0
      %1282 = vmatprep.subr.bf16.mxu0 0
      %1283 = vmatpush2.bf16.msra.mxu0 0
      %1284 = vmatprep.subr.bf16.mxu0 0
      %1285 = vmatpush2.bf16.msra.mxu0 0
      %1286 = vmatprep.subr.bf16.mxu0 0
      %1287 = vmatpush2.bf16.msra.mxu0 0
      %1288 = vmatprep.mubr.bf16.mxu0 0
      %1289 = vmatmul.mubr.bf16.gmra.mxu0 %v934
      %v1290 = vpop.f32.mrf.mxu0
      %v1291 = vadd.f32 %v989, %v1290
      %v1292 = vpop.f32.mrf.mxu0
      %v1293 = vadd.f32 %v993, %v1292
      %v1294 = vpop.f32.mrf.mxu0
      %v1295 = vadd.f32 %v989, %v1294
      %v1296 = vpop.f32.mrf.mxu0
      %v1297 = vadd.f32 %v993, %v1296
      %1298 = vmatprep.mubr.bf16.mxu0 0
      %1299 = vmatmul.mubr.bf16.gmra.mxu0 %v935
      %v1300 = vpop.f32.mrf.mxu0
      %v1301 = vadd.f32 %v989, %v1300
      %v1302 = vpop.f32.mrf.mxu0
      %v1303 = vadd.f32 %v993, %v1302
      %v1304 = vpop.f32.mrf.mxu0
      %v1305 = vpop.f32.mrf.mxu0
      %1306 = vdwg.mxu0
      %1307 = vmatprep.subr.bf16.mxu0 %v1205
      %1308 = vmatpush1.bf16.msra.mxu0 %v1204
      %1309 = vmatprep.subr.bf16.mxu0 %v1199
      %1310 = vmatpush1.bf16.msra.mxu0 %v1198
      %1311 = vmatprep.subr.bf16.mxu0 %v1193
      %1312 = vmatpush1.bf16.msra.mxu0 %v1192
      %1313 = vmatprep.subr.bf16.mxu0 %v1187
      %1314 = vmatpush1.bf16.msra.mxu0 %v1186
      %1315 = vmatprep.subr.bf16.mxu0 %v1181
      %1316 = vmatpush1.bf16.msra.mxu0 %v1180
      %1317 = vmatprep.subr.bf16.mxu0 %v1175
      %1318 = vmatpush1.bf16.msra.mxu0 %v1174
      %1319 = vmatprep.subr.bf16.mxu0 %v1169
      %1320 = vmatpush1.bf16.msra.mxu0 %v1168
      %1321 = vmatprep.subr.bf16.mxu0 %v1163
      %1322 = vmatpush1.bf16.msra.mxu0 %v1162
      %1323 = vmatprep.subr.bf16.mxu0 0
      %1324 = vmatpush2.bf16.msra.mxu0 0
      %1325 = vmatprep.subr.bf16.mxu0 0
      %1326 = vmatpush2.bf16.msra.mxu0 0
      %1327 = vmatprep.subr.bf16.mxu0 0
      %1328 = vmatpush2.bf16.msra.mxu0 0
      %1329 = vmatprep.subr.bf16.mxu0 0
      %1330 = vmatpush2.bf16.msra.mxu0 0
      %1331 = vmatprep.subr.bf16.mxu0 0
      %1332 = vmatpush2.bf16.msra.mxu0 0
      %1333 = vmatprep.subr.bf16.mxu0 0
      %1334 = vmatpush2.bf16.msra.mxu0 0
      %1335 = vmatprep.subr.bf16.mxu0 0
      %1336 = vmatpush2.bf16.msra.mxu0 0
      %1337 = vmatprep.subr.bf16.mxu0 0
      %1338 = vmatpush2.bf16.msra.mxu0 0
      %1339 = vmatprep.mubr.bf16.mxu0 0
      %1340 = vmatmul.mubr.bf16.gmra.mxu0 %v934
      %v1341 = vpop.f32.mrf.mxu0
      %v1342 = vadd.f32 %v997, %v1341
      %v1343 = vpop.f32.mrf.mxu0
      %v1344 = vadd.f32 %v1001, %v1343
      %v1345 = vpop.f32.mrf.mxu0
      %v1346 = vadd.f32 %v997, %v1345
      %v1347 = vpop.f32.mrf.mxu0
      %v1348 = vadd.f32 %v1001, %v1347
      %1349 = vmatprep.mubr.bf16.mxu0 0
      %1350 = vmatmul.mubr.bf16.gmra.mxu0 %v935
      %v1351 = vpop.f32.mrf.mxu0
      %v1352 = vadd.f32 %v997, %v1351
      %v1353 = vpop.f32.mrf.mxu0
      %v1354 = vadd.f32 %v1001, %v1353
      %v1355 = vpop.f32.mrf.mxu0
      %v1356 = vpop.f32.mrf.mxu0
      %1357 = vdwg.mxu0
      %1358 = vmatprep.subr.bf16.mxu0 %v1207
      %1359 = vmatpush1.bf16.msra.mxu0 %v1206
      %1360 = vmatprep.subr.bf16.mxu0 %v1201
      %1361 = vmatpush1.bf16.msra.mxu0 %v1200
      %1362 = vmatprep.subr.bf16.mxu0 %v1195
      %1363 = vmatpush1.bf16.msra.mxu0 %v1194
      %1364 = vmatprep.subr.bf16.mxu0 %v1189
      %1365 = vmatpush1.bf16.msra.mxu0 %v1188
      %1366 = vmatprep.subr.bf16.mxu0 %v1183
      %1367 = vmatpush1.bf16.msra.mxu0 %v1182
      %1368 = vmatprep.subr.bf16.mxu0 %v1177
      %1369 = vmatpush1.bf16.msra.mxu0 %v1176
      %1370 = vmatprep.subr.bf16.mxu0 %v1171
      %1371 = vmatpush1.bf16.msra.mxu0 %v1170
      %1372 = vmatprep.subr.bf16.mxu0 %v1165
      %1373 = vmatpush1.bf16.msra.mxu0 %v1164
      %1374 = vmatprep.subr.bf16.mxu0 0
      %1375 = vmatpush2.bf16.msra.mxu0 0
      %1376 = vmatprep.subr.bf16.mxu0 0
      %1377 = vmatpush2.bf16.msra.mxu0 0
      %1378 = vmatprep.subr.bf16.mxu0 0
      %1379 = vmatpush2.bf16.msra.mxu0 0
      %1380 = vmatprep.subr.bf16.mxu0 0
      %1381 = vmatpush2.bf16.msra.mxu0 0
      %1382 = vmatprep.subr.bf16.mxu0 0
      %1383 = vmatpush2.bf16.msra.mxu0 0
      %1384 = vmatprep.subr.bf16.mxu0 0
      %1385 = vmatpush2.bf16.msra.mxu0 0
      %1386 = vmatprep.subr.bf16.mxu0 0
      %1387 = vmatpush2.bf16.msra.mxu0 0
      %1388 = vmatprep.subr.bf16.mxu0 0
      %1389 = vmatpush2.bf16.msra.mxu0 0
      %1390 = vmatprep.mubr.bf16.mxu0 0
      %1391 = vmatmul.mubr.bf16.gmra.mxu0 %v934
      %v1392 = vpop.f32.mrf.mxu0
      %v1393 = vadd.f32 %v1005, %v1392
      %v1394 = vpop.f32.mrf.mxu0
      %v1395 = vadd.f32 %v1009, %v1394
      %v1396 = vpop.f32.mrf.mxu0
      %v1397 = vadd.f32 %v1005, %v1396
      %v1398 = vpop.f32.mrf.mxu0
      %v1399 = vadd.f32 %v1009, %v1398
      %1400 = vmatprep.mubr.bf16.mxu0 0
      %1401 = vmatmul.mubr.bf16.gmra.mxu0 %v935
      %v1402 = vpop.f32.mrf.mxu0
      %v1403 = vadd.f32 %v1005, %v1402
      %v1404 = vpop.f32.mrf.mxu0
      %v1405 = vadd.f32 %v1009, %v1404
      %v1406 = vpop.f32.mrf.mxu0
      %v1407 = vpop.f32.mrf.mxu0
      %1408 = vdwg.mxu0
      %v1409 = vlaneseq
      %v1410 = vand.u32 %v1409, 127
      %vm1411 = vcmp.lt.s32.totalorder %v1410, 17
      %v1412 = vpack.c.bf16 %v1295, %v1291
      %v1413 = vpack.c.bf16 %v1301, %v1301
      %v1414 = vpack.c.bf16 %v1297, %v1293
      %v1415 = vpack.c.bf16 %v1303, %v1303
      %v1416 = vpack.c.bf16 %v1346, %v1342
      %v1417 = vpack.c.bf16 %v1352, %v1352
      %1418 = vmatprep.subr.bf16.mxu0 0
      %1419 = vmatpush1.bf16.xpose.msra.mxu0 0
      %1420 = vmatprep.subr.bf16.mxu0 0
      %1421 = vmatpush1.bf16.xpose.msra.mxu0 0
      %1422 = vmatprep.subr.bf16.mxu0 0
      %1423 = vmatpush1.bf16.xpose.msra.mxu0 0
      %1424 = vmatprep.subr.bf16.mxu0 0
      %1425 = vmatpush1.bf16.xpose.msra.mxu0 0
      %1426 = vmatprep.subr.bf16.mxu0 0
      %1427 = vmatpush1.bf16.xpose.msra.mxu0 0
      %1428 = vmatprep.subr.bf16.mxu0 0
      %1429 = vmatpush1.bf16.xpose.msra.mxu0 0
      %1430 = vmatprep.subr.bf16.mxu0 0
      %1431 = vmatpush1.bf16.xpose.msra.mxu0 %v1415
      %1432 = vmatprep.subr.bf16.mxu0 0
      %1433 = vmatpush1.bf16.xpose.msra.mxu0 %v1414
      %1434 = vmatprep.subr.bf16.mxu0 0
      %1435 = vmatpush2.bf16.xpose.msra.mxu0 0
      %1436 = vmatprep.subr.bf16.mxu0 0
      %1437 = vmatpush2.bf16.xpose.msra.mxu0 0
      %1438 = vmatprep.subr.bf16.mxu0 0
      %1439 = vmatpush2.bf16.xpose.msra.mxu0 0
      %1440 = vmatprep.subr.bf16.mxu0 0
      %1441 = vmatpush2.bf16.xpose.msra.mxu0 0
      %1442 = vmatprep.subr.bf16.mxu0 0
      %1443 = vmatpush2.bf16.xpose.msra.mxu0 0
      %1444 = vmatprep.subr.bf16.mxu0 0
      %1445 = vmatpush2.bf16.xpose.msra.mxu0 0
      %1446 = vmatprep.subr.bf16.mxu0 0
      %1447 = vmatpush2.bf16.xpose.msra.mxu0 0
      %1448 = vmatprep.subr.bf16.mxu0 0
      %1449 = vmatpush2.bf16.xpose.msra.mxu0 0
      %1450 = vmatprep.mubr.bf16.mxu0 0
      %1451 = vmatmul.mubr.bf16.gmra.mxu0 %v1412
      %v1452 = vpop.f32.mrf.mxu0
      %v1453 = vadd.f32 0.0, %v1452
      %v1454 = vpop.f32.mrf.mxu0
      %v1455 = vpop.f32.mrf.mxu0
      %v1456 = vadd.f32 0.0, %v1455
      %v1457 = vpop.f32.mrf.mxu0
      %1458 = vmatprep.mubr.bf16.mxu0 0
      %1459 = vmatmul.mubr.bf16.gmra.mxu0 %v1413
      %v1460 = vpop.f32.mrf.mxu0
      %v1461 = vadd.f32 0.0, %v1460
      %v1462 = vpop.f32.mrf.mxu0
      %v1463 = vpop.f32.mrf.mxu0
      %v1464 = vpop.f32.mrf.mxu0
      %1465 = vdwg.mxu0
      %v1466 = vmul.f32 %v1453, 0.125
      %v1467 = vmul.f32 %v1456, 0.125
      %v1468 = vmul.f32 %v1461, 0.125
      %v1469 = vsel %vm1411, %v1466, -1e+30
      %v1470 = vsel %vm1411, %v1467, -1e+30
      %v1471 = vsel %vm1411, %v1468, -1e+30
      %vm1472 = vcmask 195584
      %v1473 = vsel %vm1472, %v1469, -inf
      %1474 = vmax.xlane.f32.xlu0 %v1473
      %v1475 = vpop.xlane.xlu0 %1474
      %v1476 = vsel %vm1472, %v1470, -inf
      %1477 = vmax.xlane.f32.xlu0 %v1476
      %v1478 = vpop.xlane.xlu0 %1477
      %v1479 = vsel %vm1472, %v1471, -inf
      %1480 = vmax.xlane.f32.xlu0 %v1479
      %v1481 = vpop.xlane.xlu0 %1480
      %v1482 = vsub.f32 %v1469, %v1475
      %v1483 = vsub.f32 %v1470, %v1478
      %v1484 = vsub.f32 %v1471, %v1481
      %v1485 = vmul.f32 %v1482, 1.442695
      %v1486 = vpow.pop %v1485
      %v1487 = vmul.f32 %v1483, 1.442695
      %v1488 = vpow.pop %v1487
      %v1489 = vmul.f32 %v1484, 1.442695
      %v1490 = vpow.pop %v1489
      %v1491 = vsel %vm1472, %v1486, 0.0
      %1492 = vadd.xlane.f32.xlu0 %v1491
      %v1493 = vpop.xlane.xlu0 %1492
      %v1494 = vsel %vm1472, %v1488, 0.0
      %1495 = vadd.xlane.f32.xlu0 %v1494
      %v1496 = vpop.xlane.xlu0 %1495
      %v1497 = vsel %vm1472, %v1490, 0.0
      %1498 = vadd.xlane.f32.xlu0 %v1497
      %v1499 = vpop.xlane.xlu0 %1498
      %v1500 = vrcp.pop %v1493
      %v1501 = vrcp.pop %v1496
      %v1502 = vrcp.pop %v1499
      %v1503 = vmul.f32 %v1486, %v1500
      %v1504 = vmul.f32 %v1488, %v1501
      %v1505 = vmul.f32 %v1490, %v1502
      %v1506 = vpack.c.bf16 %v1504, %v1503
      %v1507 = vpack.c.bf16 %v1505, %v1505
      %v1509 = vsel %vm1472, %v1506, 0
      %v1512 = vsel %vm1472, %v1507, 0
      %vm1514 = vcmask 1043456
      %v1516 = vsel %vm1514, %v1417, 0
      %1518 = vmatprep.subr.bf16.mxu0 0
      %1519 = vmatpush1.bf16.msra.mxu0 0
      %1520 = vmatprep.subr.bf16.mxu0 0
      %1521 = vmatpush1.bf16.msra.mxu0 0
      %1522 = vmatprep.subr.bf16.mxu0 0
      %1523 = vmatpush1.bf16.msra.mxu0 0
      %1524 = vmatprep.subr.bf16.mxu0 0
      %1525 = vmatpush1.bf16.msra.mxu0 0
      %1526 = vmatprep.subr.bf16.mxu0 0
      %1527 = vmatpush1.bf16.msra.mxu0 0
      %1528 = vmatprep.subr.bf16.mxu0 0
      %1529 = vmatpush1.bf16.msra.mxu0 0
      %1530 = vmatprep.subr.bf16.mxu0 0
      %1531 = vmatpush1.bf16.msra.mxu0 %v1516
      %1532 = vmatprep.subr.bf16.mxu0 0
      %1533 = vmatpush1.bf16.msra.mxu0 %v1416
      %1534 = vmatprep.subr.bf16.mxu0 0
      %1535 = vmatpush2.bf16.msra.mxu0 0
      %1536 = vmatprep.subr.bf16.mxu0 0
      %1537 = vmatpush2.bf16.msra.mxu0 0
      %1538 = vmatprep.subr.bf16.mxu0 0
      %1539 = vmatpush2.bf16.msra.mxu0 0
      %1540 = vmatprep.subr.bf16.mxu0 0
      %1541 = vmatpush2.bf16.msra.mxu0 0
      %1542 = vmatprep.subr.bf16.mxu0 0
      %1543 = vmatpush2.bf16.msra.mxu0 0
      %1544 = vmatprep.subr.bf16.mxu0 0
      %1545 = vmatpush2.bf16.msra.mxu0 0
      %1546 = vmatprep.subr.bf16.mxu0 0
      %1547 = vmatpush2.bf16.msra.mxu0 0
      %1548 = vmatprep.subr.bf16.mxu0 0
      %1549 = vmatpush2.bf16.msra.mxu0 0
      %1550 = vmatprep.mubr.bf16.mxu0 0
      %1551 = vmatmul.mubr.bf16.gmra.mxu0 %v1509
      %v1552 = vpop.f32.mrf.mxu0
      %v1553 = vadd.f32 0.0, %v1552
      %v1554 = vpop.f32.mrf.mxu0
      %v1555 = vpop.f32.mrf.mxu0
      %v1556 = vadd.f32 0.0, %v1555
      %v1557 = vpop.f32.mrf.mxu0
      %1558 = vmatprep.mubr.bf16.mxu0 0
      %1559 = vmatmul.mubr.bf16.gmra.mxu0 %v1512
      %v1560 = vpop.f32.mrf.mxu0
      %v1561 = vadd.f32 0.0, %v1560
      %v1562 = vpop.f32.mrf.mxu0
      %v1563 = vpop.f32.mrf.mxu0
      %v1564 = vpop.f32.mrf.mxu0
      %1565 = vdwg.mxu0
      %v1566 = vpack.c.bf16 %v1556, %v1553
      %v1567 = vpack.c.bf16 %v1561, %v1561
      %v1568 = vld [vmem:[%s673] sm:$0xf]
      %v1569 = vld [vmem:[%s673 + $0x4] sm:$0xf]
      %v1570 = vld [vmem:[%s673 + $0x8] sm:$0xf]
      %v1571 = vld [vmem:[%s673 + $0xc] sm:$0xf]
      %v1572 = vld [vmem:[%s673 + $0x10] sm:$0xf]
      %v1573 = vld [vmem:[%s673 + $0x14] sm:$0xf]
      %v1574 = vld [vmem:[%s673 + $0x18] sm:$0xf]
      %v1575 = vld [vmem:[%s673 + $0x1c] sm:$0xf]
      %v1576 = vld [vmem:[%s673 + $0x20] sm:$0xf]
      %v1577 = vld [vmem:[%s673 + $0x24] sm:$0xf]
      %v1578 = vld [vmem:[%s673 + $0x28] sm:$0xf]
      %v1579 = vld [vmem:[%s673 + $0x2c] sm:$0xf]
      %v1580 = vld [vmem:[%s673 + $0x30] sm:$0xf]
      %v1581 = vld [vmem:[%s673 + $0x34] sm:$0xf]
      %v1582 = vld [vmem:[%s673 + $0x38] sm:$0xf]
      %v1583 = vld [vmem:[%s673 + $0x3c] sm:$0xf]
      %v1584 = vpack.c.bf16 %v1348, %v1344
      %v1585 = vpack.c.bf16 %v1354, %v1354
      %v1586 = vpack.c.bf16 %v1397, %v1393
      %v1587 = vpack.c.bf16 %v1403, %v1403
      %v1588 = vpack.c.bf16 %v1399, %v1395
      %v1589 = vpack.c.bf16 %v1405, %v1405
      %1590 = vmatprep.subr.bf16.mxu0 0
      %1591 = vmatpush1.bf16.xpose.msra.mxu0 0
      %1592 = vmatprep.subr.bf16.mxu0 0
      %1593 = vmatpush1.bf16.xpose.msra.mxu0 0
      %1594 = vmatprep.subr.bf16.mxu0 0
      %1595 = vmatpush1.bf16.xpose.msra.mxu0 0
      %1596 = vmatprep.subr.bf16.mxu0 0
      %1597 = vmatpush1.bf16.xpose.msra.mxu0 0
      %1598 = vmatprep.subr.bf16.mxu0 0
      %1599 = vmatpush1.bf16.xpose.msra.mxu0 0
      %1600 = vmatprep.subr.bf16.mxu0 0
      %1601 = vmatpush1.bf16.xpose.msra.mxu0 0
      %1602 = vmatprep.subr.bf16.mxu0 0
      %1603 = vmatpush1.bf16.xpose.msra.mxu0 %v1587
      %1604 = vmatprep.subr.bf16.mxu0 0
      %1605 = vmatpush1.bf16.xpose.msra.mxu0 %v1586
      %1606 = vmatprep.subr.bf16.mxu0 0
      %1607 = vmatpush2.bf16.xpose.msra.mxu0 0
      %1608 = vmatprep.subr.bf16.mxu0 0
      %1609 = vmatpush2.bf16.xpose.msra.mxu0 0
      %1610 = vmatprep.subr.bf16.mxu0 0
      %1611 = vmatpush2.bf16.xpose.msra.mxu0 0
      %1612 = vmatprep.subr.bf16.mxu0 0
      %1613 = vmatpush2.bf16.xpose.msra.mxu0 0
      %1614 = vmatprep.subr.bf16.mxu0 0
      %1615 = vmatpush2.bf16.xpose.msra.mxu0 0
      %1616 = vmatprep.subr.bf16.mxu0 0
      %1617 = vmatpush2.bf16.xpose.msra.mxu0 0
      %1618 = vmatprep.subr.bf16.mxu0 0
      %1619 = vmatpush2.bf16.xpose.msra.mxu0 0
      %1620 = vmatprep.subr.bf16.mxu0 0
      %1621 = vmatpush2.bf16.xpose.msra.mxu0 0
      %1622 = vmatprep.mubr.bf16.mxu0 0
      %1623 = vmatmul.mubr.bf16.gmra.mxu0 %v1584
      %v1624 = vpop.f32.mrf.mxu0
      %v1625 = vadd.f32 0.0, %v1624
      %v1626 = vpop.f32.mrf.mxu0
      %v1627 = vpop.f32.mrf.mxu0
      %v1628 = vadd.f32 0.0, %v1627
      %v1629 = vpop.f32.mrf.mxu0
      %1630 = vmatprep.mubr.bf16.mxu0 0
      %1631 = vmatmul.mubr.bf16.gmra.mxu0 %v1585
      %v1632 = vpop.f32.mrf.mxu0
      %v1633 = vadd.f32 0.0, %v1632
      %v1634 = vpop.f32.mrf.mxu0
      %v1635 = vpop.f32.mrf.mxu0
      %v1636 = vpop.f32.mrf.mxu0
      %1637 = vdwg.mxu0
      %v1638 = vmul.f32 %v1625, 0.125
      %v1639 = vmul.f32 %v1628, 0.125
      %v1640 = vmul.f32 %v1633, 0.125
      %v1641 = vsel %vm1411, %v1638, -1e+30
      %v1642 = vsel %vm1411, %v1639, -1e+30
      %v1643 = vsel %vm1411, %v1640, -1e+30
      %v1644 = vsel %vm1472, %v1641, -inf
      %1645 = vmax.xlane.f32.xlu0 %v1644
      %v1646 = vpop.xlane.xlu0 %1645
      %v1647 = vsel %vm1472, %v1642, -inf
      %1648 = vmax.xlane.f32.xlu0 %v1647
      %v1649 = vpop.xlane.xlu0 %1648
      %v1650 = vsel %vm1472, %v1643, -inf
      %1651 = vmax.xlane.f32.xlu0 %v1650
      %v1652 = vpop.xlane.xlu0 %1651
      %v1653 = vsub.f32 %v1641, %v1646
      %v1654 = vsub.f32 %v1642, %v1649
      %v1655 = vsub.f32 %v1643, %v1652
      %v1656 = vmul.f32 %v1653, 1.442695
      %v1657 = vpow.pop %v1656
      %v1658 = vmul.f32 %v1654, 1.442695
      %v1659 = vpow.pop %v1658
      %v1660 = vmul.f32 %v1655, 1.442695
      %v1661 = vpow.pop %v1660
      %v1662 = vsel %vm1472, %v1657, 0.0
      %1663 = vadd.xlane.f32.xlu0 %v1662
      %v1664 = vpop.xlane.xlu0 %1663
      %v1665 = vsel %vm1472, %v1659, 0.0
      %1666 = vadd.xlane.f32.xlu0 %v1665
      %v1667 = vpop.xlane.xlu0 %1666
      %v1668 = vsel %vm1472, %v1661, 0.0
      %1669 = vadd.xlane.f32.xlu0 %v1668
      %v1670 = vpop.xlane.xlu0 %1669
      %v1671 = vrcp.pop %v1664
      %v1672 = vrcp.pop %v1667
      %v1673 = vrcp.pop %v1670
      %v1674 = vmul.f32 %v1657, %v1671
      %v1675 = vmul.f32 %v1659, %v1672
      %v1676 = vmul.f32 %v1661, %v1673
      %v1677 = vpack.c.bf16 %v1675, %v1674
      %v1678 = vpack.c.bf16 %v1676, %v1676
      %v1680 = vsel %vm1472, %v1677, 0
      %v1683 = vsel %vm1472, %v1678, 0
      %v1686 = vsel %vm1514, %v1589, 0
      %1688 = vmatprep.subr.bf16.mxu0 0
      %1689 = vmatpush1.bf16.msra.mxu0 0
      %1690 = vmatprep.subr.bf16.mxu0 0
      %1691 = vmatpush1.bf16.msra.mxu0 0
      %1692 = vmatprep.subr.bf16.mxu0 0
      %1693 = vmatpush1.bf16.msra.mxu0 0
      %1694 = vmatprep.subr.bf16.mxu0 0
      %1695 = vmatpush1.bf16.msra.mxu0 0
      %1696 = vmatprep.subr.bf16.mxu0 0
      %1697 = vmatpush1.bf16.msra.mxu0 0
      %1698 = vmatprep.subr.bf16.mxu0 0
      %1699 = vmatpush1.bf16.msra.mxu0 0
      %1700 = vmatprep.subr.bf16.mxu0 0
      %1701 = vmatpush1.bf16.msra.mxu0 %v1686
      %1702 = vmatprep.subr.bf16.mxu0 0
      %1703 = vmatpush1.bf16.msra.mxu0 %v1588
      %1704 = vmatprep.subr.bf16.mxu0 0
      %1705 = vmatpush2.bf16.msra.mxu0 0
      %1706 = vmatprep.subr.bf16.mxu0 0
      %1707 = vmatpush2.bf16.msra.mxu0 0
      %1708 = vmatprep.subr.bf16.mxu0 0
      %1709 = vmatpush2.bf16.msra.mxu0 0
      %1710 = vmatprep.subr.bf16.mxu0 0
      %1711 = vmatpush2.bf16.msra.mxu0 0
      %1712 = vmatprep.subr.bf16.mxu0 0
      %1713 = vmatpush2.bf16.msra.mxu0 0
      %1714 = vmatprep.subr.bf16.mxu0 0
      %1715 = vmatpush2.bf16.msra.mxu0 0
      %1716 = vmatprep.subr.bf16.mxu0 0
      %1717 = vmatpush2.bf16.msra.mxu0 0
      %1718 = vmatprep.subr.bf16.mxu0 0
      %1719 = vmatpush2.bf16.msra.mxu0 0
      %1720 = vmatprep.mubr.bf16.mxu0 0
      %1721 = vmatmul.mubr.bf16.gmra.mxu0 %v1680
      %v1722 = vpop.f32.mrf.mxu0
      %v1723 = vadd.f32 0.0, %v1722
      %v1724 = vpop.f32.mrf.mxu0
      %v1725 = vpop.f32.mrf.mxu0
      %v1726 = vadd.f32 0.0, %v1725
      %v1727 = vpop.f32.mrf.mxu0
      %1728 = vmatprep.mubr.bf16.mxu0 0
      %1729 = vmatmul.mubr.bf16.gmra.mxu0 %v1683
      %v1730 = vpop.f32.mrf.mxu0
      %v1731 = vadd.f32 0.0, %v1730
      %v1732 = vpop.f32.mrf.mxu0
      %v1733 = vpop.f32.mrf.mxu0
      %v1734 = vpop.f32.mrf.mxu0
      %1735 = vdwg.mxu0
      %v1736 = vpack.c.bf16 %v1726, %v1723
      %v1737 = vpack.c.bf16 %v1731, %v1731
      %v1738 = vld [vmem:[%s673 + $0x40] sm:$0xf]
      %v1739 = vld [vmem:[%s673 + $0x44] sm:$0xf]
      %v1740 = vld [vmem:[%s673 + $0x48] sm:$0xf]
      %v1741 = vld [vmem:[%s673 + $0x4c] sm:$0xf]
      %v1742 = vld [vmem:[%s673 + $0x50] sm:$0xf]
      %v1743 = vld [vmem:[%s673 + $0x54] sm:$0xf]
      %v1744 = vld [vmem:[%s673 + $0x58] sm:$0xf]
      %v1745 = vld [vmem:[%s673 + $0x5c] sm:$0xf]
      %v1746 = vld [vmem:[%s673 + $0x60] sm:$0xf]
      %v1747 = vld [vmem:[%s673 + $0x64] sm:$0xf]
      %v1748 = vld [vmem:[%s673 + $0x68] sm:$0xf]
      %v1749 = vld [vmem:[%s673 + $0x6c] sm:$0xf]
      %v1750 = vld [vmem:[%s673 + $0x70] sm:$0xf]
      %v1751 = vld [vmem:[%s673 + $0x74] sm:$0xf]
      %v1752 = vld [vmem:[%s673 + $0x78] sm:$0xf]
      %v1753 = vld [vmem:[%s673 + $0x7c] sm:$0xf]
      %v1770 = vunpack.c.l.b16 %v1738
      %v1771 = vunpack.c.l.b16 %v1739
      %v1772 = vunpack.c.l.b16 %v1740
      %v1773 = vunpack.c.l.b16 %v1741
      %v1774 = vunpack.c.l.b16 %v1742
      %v1775 = vunpack.c.l.b16 %v1743
      %v1776 = vunpack.c.l.b16 %v1744
      %v1777 = vunpack.c.l.b16 %v1745
      %v1778 = vunpack.c.l.b16 %v1746
      %v1779 = vunpack.c.l.b16 %v1747
      %v1780 = vunpack.c.l.b16 %v1748
      %v1781 = vunpack.c.l.b16 %v1749
      %v1782 = vunpack.c.l.b16 %v1750
      %v1783 = vunpack.c.l.b16 %v1751
      %v1784 = vunpack.c.l.b16 %v1752
      %v1785 = vunpack.c.l.b16 %v1753
      %v1786 = vpack.c.b16 %v1771, %v1770
      %v1787 = vpack.c.b16 %v1773, %v1772
      %v1788 = vpack.c.b16 %v1775, %v1774
      %v1789 = vpack.c.b16 %v1777, %v1776
      %v1790 = vpack.c.b16 %v1779, %v1778
      %v1791 = vpack.c.b16 %v1781, %v1780
      %v1792 = vpack.c.b16 %v1783, %v1782
      %v1793 = vpack.c.b16 %v1785, %v1784
      %1802 = vmatprep.subr.bf16.mxu0 0
      %1803 = vmatpush1.bf16.msra.mxu0 %v1793
      %1804 = vmatprep.subr.bf16.mxu0 0
      %1805 = vmatpush1.bf16.msra.mxu0 %v1792
      %1806 = vmatprep.subr.bf16.mxu0 0
      %1807 = vmatpush1.bf16.msra.mxu0 %v1791
      %1808 = vmatprep.subr.bf16.mxu0 0
      %1809 = vmatpush1.bf16.msra.mxu0 %v1790
      %1810 = vmatprep.subr.bf16.mxu0 0
      %1811 = vmatpush1.bf16.msra.mxu0 %v1789
      %1812 = vmatprep.subr.bf16.mxu0 0
      %1813 = vmatpush1.bf16.msra.mxu0 %v1788
      %1814 = vmatprep.subr.bf16.mxu0 0
      %1815 = vmatpush1.bf16.msra.mxu0 %v1787
      %1816 = vmatprep.subr.bf16.mxu0 0
      %1817 = vmatpush1.bf16.msra.mxu0 %v1786
      %1818 = vmatprep.subr.bf16.mxu0 0
      %1819 = vmatpush2.bf16.msra.mxu0 0
      %1820 = vmatprep.subr.bf16.mxu0 0
      %1821 = vmatpush2.bf16.msra.mxu0 0
      %1822 = vmatprep.subr.bf16.mxu0 0
      %1823 = vmatpush2.bf16.msra.mxu0 0
      %1824 = vmatprep.subr.bf16.mxu0 0
      %1825 = vmatpush2.bf16.msra.mxu0 0
      %1826 = vmatprep.subr.bf16.mxu0 0
      %1827 = vmatpush2.bf16.msra.mxu0 0
      %1828 = vmatprep.subr.bf16.mxu0 0
      %1829 = vmatpush2.bf16.msra.mxu0 0
      %1830 = vmatprep.subr.bf16.mxu0 0
      %1831 = vmatpush2.bf16.msra.mxu0 0
      %1832 = vmatprep.subr.bf16.mxu0 0
      %1833 = vmatpush2.bf16.msra.mxu0 0
      %1834 = vmatprep.mubr.bf16.mxu0 0
      %1835 = vmatmul.mubr.bf16.gmra.mxu0 %v1736
      %v1836 = vpop.f32.mrf.mxu0
      %v1837 = vadd.f32 0.0, %v1836
      %v1838 = vpop.f32.mrf.mxu0
      %v1839 = vpop.f32.mrf.mxu0
      %v1840 = vadd.f32 0.0, %v1839
      %v1841 = vpop.f32.mrf.mxu0
      %1842 = vmatprep.mubr.bf16.mxu0 0
      %1843 = vmatmul.mubr.bf16.gmra.mxu0 %v1737
      %v1844 = vpop.f32.mrf.mxu0
      %v1845 = vadd.f32 0.0, %v1844
      %v1846 = vpop.f32.mrf.mxu0
      %v1847 = vpop.f32.mrf.mxu0
      %v1848 = vpop.f32.mrf.mxu0
      %1849 = vdwg.mxu0
      %v1866 = vunpack.c.l.b16 %v1568
      %v1867 = vunpack.c.l.b16 %v1569
      %v1868 = vunpack.c.l.b16 %v1570
      %v1869 = vunpack.c.l.b16 %v1571
      %v1870 = vunpack.c.l.b16 %v1572
      %v1871 = vunpack.c.l.b16 %v1573
      %v1872 = vunpack.c.l.b16 %v1574
      %v1873 = vunpack.c.l.b16 %v1575
      %v1874 = vunpack.c.l.b16 %v1576
      %v1875 = vunpack.c.l.b16 %v1577
      %v1876 = vunpack.c.l.b16 %v1578
      %v1877 = vunpack.c.l.b16 %v1579
      %v1878 = vunpack.c.l.b16 %v1580
      %v1879 = vunpack.c.l.b16 %v1581
      %v1880 = vunpack.c.l.b16 %v1582
      %v1881 = vunpack.c.l.b16 %v1583
      %v1882 = vpack.c.b16 %v1867, %v1866
      %v1883 = vpack.c.b16 %v1869, %v1868
      %v1884 = vpack.c.b16 %v1871, %v1870
      %v1885 = vpack.c.b16 %v1873, %v1872
      %v1886 = vpack.c.b16 %v1875, %v1874
      %v1887 = vpack.c.b16 %v1877, %v1876
      %v1888 = vpack.c.b16 %v1879, %v1878
      %v1889 = vpack.c.b16 %v1881, %v1880
      %1898 = vmatprep.subr.bf16.mxu0 0
      %1899 = vmatpush1.bf16.msra.mxu0 %v1889
      %1900 = vmatprep.subr.bf16.mxu0 0
      %1901 = vmatpush1.bf16.msra.mxu0 %v1888
      %1902 = vmatprep.subr.bf16.mxu0 0
      %1903 = vmatpush1.bf16.msra.mxu0 %v1887
      %1904 = vmatprep.subr.bf16.mxu0 0
      %1905 = vmatpush1.bf16.msra.mxu0 %v1886
      %1906 = vmatprep.subr.bf16.mxu0 0
      %1907 = vmatpush1.bf16.msra.mxu0 %v1885
      %1908 = vmatprep.subr.bf16.mxu0 0
      %1909 = vmatpush1.bf16.msra.mxu0 %v1884
      %1910 = vmatprep.subr.bf16.mxu0 0
      %1911 = vmatpush1.bf16.msra.mxu0 %v1883
      %1912 = vmatprep.subr.bf16.mxu0 0
      %1913 = vmatpush1.bf16.msra.mxu0 %v1882
      %1914 = vmatprep.subr.bf16.mxu0 0
      %1915 = vmatpush2.bf16.msra.mxu0 0
      %1916 = vmatprep.subr.bf16.mxu0 0
      %1917 = vmatpush2.bf16.msra.mxu0 0
      %1918 = vmatprep.subr.bf16.mxu0 0
      %1919 = vmatpush2.bf16.msra.mxu0 0
      %1920 = vmatprep.subr.bf16.mxu0 0
      %1921 = vmatpush2.bf16.msra.mxu0 0
      %1922 = vmatprep.subr.bf16.mxu0 0
      %1923 = vmatpush2.bf16.msra.mxu0 0
      %1924 = vmatprep.subr.bf16.mxu0 0
      %1925 = vmatpush2.bf16.msra.mxu0 0
      %1926 = vmatprep.subr.bf16.mxu0 0
      %1927 = vmatpush2.bf16.msra.mxu0 0
      %1928 = vmatprep.subr.bf16.mxu0 0
      %1929 = vmatpush2.bf16.msra.mxu0 0
      %1930 = vmatprep.mubr.bf16.mxu0 0
      %1931 = vmatmul.mubr.bf16.gmra.mxu0 %v1566
      %v1932 = vpop.f32.mrf.mxu0
      %v1933 = vadd.f32 %v1837, %v1932
      %v1934 = vpop.f32.mrf.mxu0
      %v1935 = vpop.f32.mrf.mxu0
      %v1936 = vadd.f32 %v1840, %v1935
      %v1937 = vpop.f32.mrf.mxu0
      %1938 = vmatprep.mubr.bf16.mxu0 0
      %1939 = vmatmul.mubr.bf16.gmra.mxu0 %v1567
      %v1940 = vpop.f32.mrf.mxu0
      %v1941 = vadd.f32 %v1845, %v1940
      %v1942 = vpop.f32.mrf.mxu0
      %v1943 = vpop.f32.mrf.mxu0
      %v1944 = vpop.f32.mrf.mxu0
      %1945 = vdwg.mxu0
      %v1946 = vadd.f32 %v877, %v1933
      %v1947 = vadd.f32 %v878, %v1936
      %v1948 = vadd.f32 %v879, %v1941
      %v1949 = vld [vmem:[%s676] sm:$0x1]
      %v1951 = vlaneseq
      %v1952 = vshrl.u32 %v1951, 7
      %v1953 = vsub.s32 0, %v1952
      %v1954 = vrot.slane %v1949, %v1953
      %v1956 = vadd.f32 %v1946, %v1954
      %v1957 = vadd.f32 %v1947, %v1954
      %v1958 = vadd.f32 %v1948, %v1954
      %1959 = vadd.xlane.f32.xlu0 %v1956
      %v1960 = vpop.xlane.xlu0 %1959
      %1961 = vadd.xlane.f32.xlu0 %v1957
      %v1962 = vpop.xlane.xlu0 %1961
      %1963 = vadd.xlane.f32.xlu0 %v1958
      %v1964 = vpop.xlane.xlu0 %1963
      %v1965 = vmul.f32 %v1960, %v886
      %v1966 = vmul.f32 %v1962, %v886
      %v1967 = vmul.f32 %v1964, %v886
      %v1968 = vsub.f32 %v1956, %v1965
      %v1969 = vsub.f32 %v1957, %v1966
      %v1970 = vsub.f32 %v1958, %v1967
      %v1971 = vmul.f32 %v1968, %v1968
      %v1972 = vmul.f32 %v1969, %v1969
      %v1973 = vmul.f32 %v1970, %v1970
      %1974 = vadd.xlane.f32.xlu0 %v1971
      %v1975 = vpop.xlane.xlu0 %1974
      %1976 = vadd.xlane.f32.xlu0 %v1972
      %v1977 = vpop.xlane.xlu0 %1976
      %1978 = vadd.xlane.f32.xlu0 %v1973
      %v1979 = vpop.xlane.xlu0 %1978
      %v1980 = vmul.f32 %v1975, %v886
      %v1981 = vmul.f32 %v1977, %v886
      %v1982 = vmul.f32 %v1979, %v886
      %v1983 = vadd.f32 %v1980, 1e-06
      %v1984 = vadd.f32 %v1981, 1e-06
      %v1985 = vadd.f32 %v1982, 1e-06
      %v1986 = vrsqrt.pop %v1983
      %v1987 = vrsqrt.pop %v1984
      %v1988 = vrsqrt.pop %v1985
      %v1989 = vmul.f32 %v1968, %v1986
      %v1990 = vmul.f32 %v1969, %v1987
      %v1991 = vmul.f32 %v1970, %v1988
      %v1992 = vld [vmem:[%s679] sm:$0x1]
      %v1994 = vlaneseq
      %v1995 = vshrl.u32 %v1994, 7
      %v1996 = vsub.s32 0, %v1995
      %v1997 = vrot.slane %v1992, %v1996
      %v1999 = vmul.f32 %v1989, %v1997
      %v2000 = vmul.f32 %v1990, %v1997
      %v2001 = vmul.f32 %v1991, %v1997
      %v2002 = vld [vmem:[%s682] sm:$0x1]
      %v2004 = vlaneseq
      %v2005 = vshrl.u32 %v2004, 7
      %v2006 = vsub.s32 0, %v2005
      %v2007 = vrot.slane %v2002, %v2006
      %v2009 = vadd.f32 %v1999, %v2007
      %v2010 = vadd.f32 %v2000, %v2007
      %v2011 = vadd.f32 %v2001, %v2007
      %v2012 = vpack.c.bf16 %v2010, %v2009
      %v2013 = vpack.c.bf16 %v2011, %v2011
      %v2014 = vld [vmem:[%s687] sm:$0xff]
      %v2015 = vld [vmem:[%s687 + $0x8] sm:$0xff]
      %v2016 = vld [vmem:[%s687 + $0x10] sm:$0xff]
      %v2017 = vld [vmem:[%s687 + $0x18] sm:$0xff]
      %v2018 = vld [vmem:[%s687 + $0x20] sm:$0xff]
      %v2019 = vld [vmem:[%s687 + $0x28] sm:$0xff]
      %v2020 = vld [vmem:[%s687 + $0x30] sm:$0xff]
      %v2021 = vld [vmem:[%s687 + $0x38] sm:$0xff]
      %v2022 = vld [vmem:[%s687 + $0x40] sm:$0xff]
      %v2023 = vld [vmem:[%s687 + $0x48] sm:$0xff]
      %v2024 = vld [vmem:[%s687 + $0x50] sm:$0xff]
      %v2025 = vld [vmem:[%s687 + $0x58] sm:$0xff]
      %v2026 = vld [vmem:[%s687 + $0x60] sm:$0xff]
      %v2027 = vld [vmem:[%s687 + $0x68] sm:$0xff]
      %v2028 = vld [vmem:[%s687 + $0x70] sm:$0xff]
      %v2029 = vld [vmem:[%s687 + $0x78] sm:$0xff]
      %v2030 = vld [vmem:[%s691] sm:$0x3]
      %v2032 = vlaneseq
      %v2033 = vshrl.u32 %v2032, 7
      %v2034 = vsub.s32 0, %v2033
      %v2035 = vrot.slane %v2030, %v2034
      %v2036 = vlaneseq
      %v2037 = vshrl.u32 %v2036, 7
      %v2038 = vsub.s32 1, %v2037
      %v2039 = vrot.slane %v2030, %v2038
      %v2058 = vunpack.c.l.b16 %v2014
      %v2059 = vunpack.c.h.b16 %v2014
      %v2060 = vunpack.c.l.b16 %v2015
      %v2061 = vunpack.c.h.b16 %v2015
      %v2062 = vunpack.c.l.b16 %v2016
      %v2063 = vunpack.c.h.b16 %v2016
      %v2064 = vunpack.c.l.b16 %v2017
      %v2065 = vunpack.c.h.b16 %v2017
      %v2066 = vunpack.c.l.b16 %v2018
      %v2067 = vunpack.c.h.b16 %v2018
      %v2068 = vunpack.c.l.b16 %v2019
      %v2069 = vunpack.c.h.b16 %v2019
      %v2070 = vunpack.c.l.b16 %v2020
      %v2071 = vunpack.c.h.b16 %v2020
      %v2072 = vunpack.c.l.b16 %v2021
      %v2073 = vunpack.c.h.b16 %v2021
      %v2074 = vunpack.c.l.b16 %v2022
      %v2075 = vunpack.c.h.b16 %v2022
      %v2076 = vunpack.c.l.b16 %v2023
      %v2077 = vunpack.c.h.b16 %v2023
      %v2078 = vunpack.c.l.b16 %v2024
      %v2079 = vunpack.c.h.b16 %v2024
      %v2080 = vunpack.c.l.b16 %v2025
      %v2081 = vunpack.c.h.b16 %v2025
      %v2082 = vunpack.c.l.b16 %v2026
      %v2083 = vunpack.c.h.b16 %v2026
      %v2084 = vunpack.c.l.b16 %v2027
      %v2085 = vunpack.c.h.b16 %v2027
      %v2086 = vunpack.c.l.b16 %v2028
      %v2087 = vunpack.c.h.b16 %v2028
      %v2088 = vunpack.c.l.b16 %v2029
      %v2089 = vunpack.c.h.b16 %v2029
      %v2090 = vpack.c.b16 %v2060, %v2058
      %v2091 = vpack.c.b16 %v2061, %v2059
      %v2092 = vpack.c.b16 %v2064, %v2062
      %v2093 = vpack.c.b16 %v2065, %v2063
      %v2094 = vpack.c.b16 %v2068, %v2066
      %v2095 = vpack.c.b16 %v2069, %v2067
      %v2096 = vpack.c.b16 %v2072, %v2070
      %v2097 = vpack.c.b16 %v2073, %v2071
      %v2098 = vpack.c.b16 %v2076, %v2074
      %v2099 = vpack.c.b16 %v2077, %v2075
      %v2100 = vpack.c.b16 %v2080, %v2078
      %v2101 = vpack.c.b16 %v2081, %v2079
      %v2102 = vpack.c.b16 %v2084, %v2082
      %v2103 = vpack.c.b16 %v2085, %v2083
      %v2104 = vpack.c.b16 %v2088, %v2086
      %v2105 = vpack.c.b16 %v2089, %v2087
      %2122 = vmatprep.subr.bf16.mxu0 %v2105
      %2123 = vmatpush1.bf16.msra.mxu0 %v2104
      %2124 = vmatprep.subr.bf16.mxu0 %v2103
      %2125 = vmatpush1.bf16.msra.mxu0 %v2102
      %2126 = vmatprep.subr.bf16.mxu0 %v2101
      %2127 = vmatpush1.bf16.msra.mxu0 %v2100
      %2128 = vmatprep.subr.bf16.mxu0 %v2099
      %2129 = vmatpush1.bf16.msra.mxu0 %v2098
      %2130 = vmatprep.subr.bf16.mxu0 %v2097
      %2131 = vmatpush1.bf16.msra.mxu0 %v2096
      %2132 = vmatprep.subr.bf16.mxu0 %v2095
      %2133 = vmatpush1.bf16.msra.mxu0 %v2094
      %2134 = vmatprep.subr.bf16.mxu0 %v2093
      %2135 = vmatpush1.bf16.msra.mxu0 %v2092
      %2136 = vmatprep.subr.bf16.mxu0 %v2091
      %2137 = vmatpush1.bf16.msra.mxu0 %v2090
      %2138 = vmatprep.subr.bf16.mxu0 0
      %2139 = vmatpush2.bf16.msra.mxu0 0
      %2140 = vmatprep.subr.bf16.mxu0 0
      %2141 = vmatpush2.bf16.msra.mxu0 0
      %2142 = vmatprep.subr.bf16.mxu0 0
      %2143 = vmatpush2.bf16.msra.mxu0 0
      %2144 = vmatprep.subr.bf16.mxu0 0
      %2145 = vmatpush2.bf16.msra.mxu0 0
      %2146 = vmatprep.subr.bf16.mxu0 0
      %2147 = vmatpush2.bf16.msra.mxu0 0
      %2148 = vmatprep.subr.bf16.mxu0 0
      %2149 = vmatpush2.bf16.msra.mxu0 0
      %2150 = vmatprep.subr.bf16.mxu0 0
      %2151 = vmatpush2.bf16.msra.mxu0 0
      %2152 = vmatprep.subr.bf16.mxu0 0
      %2153 = vmatpush2.bf16.msra.mxu0 0
      %2154 = vmatprep.mubr.bf16.mxu0 0
      %2155 = vmatmul.mubr.bf16.gmra.mxu0 %v2012
      %v2156 = vpop.f32.mrf.mxu0
      %v2157 = vadd.f32 %v2035, %v2156
      %v2158 = vpop.f32.mrf.mxu0
      %v2159 = vadd.f32 %v2039, %v2158
      %v2160 = vpop.f32.mrf.mxu0
      %v2161 = vadd.f32 %v2035, %v2160
      %v2162 = vpop.f32.mrf.mxu0
      %v2163 = vadd.f32 %v2039, %v2162
      %2164 = vmatprep.mubr.bf16.mxu0 0
      %2165 = vmatmul.mubr.bf16.gmra.mxu0 %v2013
      %v2166 = vpop.f32.mrf.mxu0
      %v2167 = vadd.f32 %v2035, %v2166
      %v2168 = vpop.f32.mrf.mxu0
      %v2169 = vadd.f32 %v2039, %v2168
      %v2170 = vpop.f32.mrf.mxu0
      %v2171 = vpop.f32.mrf.mxu0
      %2172 = vdwg.mxu0
      %v2173 = vmul.f32 %v2157, 0.5
      %v2174 = vmul.f32 %v2159, 0.5
      %v2175 = vmul.f32 %v2161, 0.5
      %v2176 = vmul.f32 %v2163, 0.5
      %v2177 = vmul.f32 %v2167, 0.5
      %v2178 = vmul.f32 %v2169, 0.5
      %v2179 = vmul.f32 %v2157, 0.70710677
      %v2180 = vmul.f32 %v2159, 0.70710677
      %v2181 = vmul.f32 %v2161, 0.70710677
      %v2182 = vmul.f32 %v2163, 0.70710677
      %v2183 = vmul.f32 %v2167, 0.70710677
      %v2184 = vmul.f32 %v2169, 0.70710677
      %v2185 = verf.f32.pop %v2179
      %v2186 = verf.f32.pop %v2180
      %v2187 = verf.f32.pop %v2181
      %v2188 = verf.f32.pop %v2182
      %v2189 = verf.f32.pop %v2183
      %v2190 = verf.f32.pop %v2184
      %v2191 = vadd.f32 %v2185, 1.0
      %v2192 = vadd.f32 %v2186, 1.0
      %v2193 = vadd.f32 %v2187, 1.0
      %v2194 = vadd.f32 %v2188, 1.0
      %v2195 = vadd.f32 %v2189, 1.0
      %v2196 = vadd.f32 %v2190, 1.0
      %v2197 = vmul.f32 %v2173, %v2191
      %v2198 = vmul.f32 %v2174, %v2192
      %v2199 = vmul.f32 %v2175, %v2193
      %v2200 = vmul.f32 %v2176, %v2194
      %v2201 = vmul.f32 %v2177, %v2195
      %v2202 = vmul.f32 %v2178, %v2196
      %v2203 = vpack.c.bf16 %v2199, %v2197
      %v2204 = vpack.c.bf16 %v2200, %v2198
      %v2205 = vpack.c.bf16 %v2201, %v2201
      %v2206 = vpack.c.bf16 %v2202, %v2202
      %v2207 = vld [vmem:[%s696] sm:$0xf]
      %v2208 = vld [vmem:[%s696 + $0x4] sm:$0xf]
      %v2209 = vld [vmem:[%s696 + $0x8] sm:$0xf]
      %v2210 = vld [vmem:[%s696 + $0xc] sm:$0xf]
      %v2211 = vld [vmem:[%s696 + $0x10] sm:$0xf]
      %v2212 = vld [vmem:[%s696 + $0x14] sm:$0xf]
      %v2213 = vld [vmem:[%s696 + $0x18] sm:$0xf]
      %v2214 = vld [vmem:[%s696 + $0x1c] sm:$0xf]
      %v2215 = vld [vmem:[%s696 + $0x20] sm:$0xf]
      %v2216 = vld [vmem:[%s696 + $0x24] sm:$0xf]
      %v2217 = vld [vmem:[%s696 + $0x28] sm:$0xf]
      %v2218 = vld [vmem:[%s696 + $0x2c] sm:$0xf]
      %v2219 = vld [vmem:[%s696 + $0x30] sm:$0xf]
      %v2220 = vld [vmem:[%s696 + $0x34] sm:$0xf]
      %v2221 = vld [vmem:[%s696 + $0x38] sm:$0xf]
      %v2222 = vld [vmem:[%s696 + $0x3c] sm:$0xf]
      %v2223 = vld [vmem:[%s696 + $0x40] sm:$0xf]
      %v2224 = vld [vmem:[%s696 + $0x44] sm:$0xf]
      %v2225 = vld [vmem:[%s696 + $0x48] sm:$0xf]
      %v2226 = vld [vmem:[%s696 + $0x4c] sm:$0xf]
      %v2227 = vld [vmem:[%s696 + $0x50] sm:$0xf]
      %v2228 = vld [vmem:[%s696 + $0x54] sm:$0xf]
      %v2229 = vld [vmem:[%s696 + $0x58] sm:$0xf]
      %v2230 = vld [vmem:[%s696 + $0x5c] sm:$0xf]
      %v2231 = vld [vmem:[%s696 + $0x60] sm:$0xf]
      %v2232 = vld [vmem:[%s696 + $0x64] sm:$0xf]
      %v2233 = vld [vmem:[%s696 + $0x68] sm:$0xf]
      %v2234 = vld [vmem:[%s696 + $0x6c] sm:$0xf]
      %v2235 = vld [vmem:[%s696 + $0x70] sm:$0xf]
      %v2236 = vld [vmem:[%s696 + $0x74] sm:$0xf]
      %v2237 = vld [vmem:[%s696 + $0x78] sm:$0xf]
      %v2238 = vld [vmem:[%s696 + $0x7c] sm:$0xf]
      %v2239 = vld [vmem:[%s699] sm:$0x1]
      %v2241 = vlaneseq
      %v2242 = vshrl.u32 %v2241, 7
      %v2243 = vsub.s32 0, %v2242
      %v2244 = vrot.slane %v2239, %v2243
      %v2278 = vunpack.c.l.b16 %v2207
      %v2279 = vunpack.c.l.b16 %v2208
      %v2280 = vunpack.c.l.b16 %v2209
      %v2281 = vunpack.c.l.b16 %v2210
      %v2282 = vunpack.c.l.b16 %v2211
      %v2283 = vunpack.c.l.b16 %v2212
      %v2284 = vunpack.c.l.b16 %v2213
      %v2285 = vunpack.c.l.b16 %v2214
      %v2286 = vunpack.c.l.b16 %v2215
      %v2287 = vunpack.c.l.b16 %v2216
      %v2288 = vunpack.c.l.b16 %v2217
      %v2289 = vunpack.c.l.b16 %v2218
      %v2290 = vunpack.c.l.b16 %v2219
      %v2291 = vunpack.c.l.b16 %v2220
      %v2292 = vunpack.c.l.b16 %v2221
      %v2293 = vunpack.c.l.b16 %v2222
      %v2294 = vunpack.c.l.b16 %v2223
      %v2295 = vunpack.c.l.b16 %v2224
      %v2296 = vunpack.c.l.b16 %v2225
      %v2297 = vunpack.c.l.b16 %v2226
      %v2298 = vunpack.c.l.b16 %v2227
      %v2299 = vunpack.c.l.b16 %v2228
      %v2300 = vunpack.c.l.b16 %v2229
      %v2301 = vunpack.c.l.b16 %v2230
      %v2302 = vunpack.c.l.b16 %v2231
      %v2303 = vunpack.c.l.b16 %v2232
      %v2304 = vunpack.c.l.b16 %v2233
      %v2305 = vunpack.c.l.b16 %v2234
      %v2306 = vunpack.c.l.b16 %v2235
      %v2307 = vunpack.c.l.b16 %v2236
      %v2308 = vunpack.c.l.b16 %v2237
      %v2309 = vunpack.c.l.b16 %v2238
      %v2310 = vpack.c.b16 %v2279, %v2278
      %v2311 = vpack.c.b16 %v2281, %v2280
      %v2312 = vpack.c.b16 %v2283, %v2282
      %v2313 = vpack.c.b16 %v2285, %v2284
      %v2314 = vpack.c.b16 %v2287, %v2286
      %v2315 = vpack.c.b16 %v2289, %v2288
      %v2316 = vpack.c.b16 %v2291, %v2290
      %v2317 = vpack.c.b16 %v2293, %v2292
      %v2318 = vpack.c.b16 %v2295, %v2294
      %v2319 = vpack.c.b16 %v2297, %v2296
      %v2320 = vpack.c.b16 %v2299, %v2298
      %v2321 = vpack.c.b16 %v2301, %v2300
      %v2322 = vpack.c.b16 %v2303, %v2302
      %v2323 = vpack.c.b16 %v2305, %v2304
      %v2324 = vpack.c.b16 %v2307, %v2306
      %v2325 = vpack.c.b16 %v2309, %v2308
      %2342 = vmatprep.subr.bf16.mxu0 0
      %2343 = vmatpush1.bf16.msra.mxu0 %v2317
      %2344 = vmatprep.subr.bf16.mxu0 0
      %2345 = vmatpush1.bf16.msra.mxu0 %v2316
      %2346 = vmatprep.subr.bf16.mxu0 0
      %2347 = vmatpush1.bf16.msra.mxu0 %v2315
      %2348 = vmatprep.subr.bf16.mxu0 0
      %2349 = vmatpush1.bf16.msra.mxu0 %v2314
      %2350 = vmatprep.subr.bf16.mxu0 0
      %2351 = vmatpush1.bf16.msra.mxu0 %v2313
      %2352 = vmatprep.subr.bf16.mxu0 0
      %2353 = vmatpush1.bf16.msra.mxu0 %v2312
      %2354 = vmatprep.subr.bf16.mxu0 0
      %2355 = vmatpush1.bf16.msra.mxu0 %v2311
      %2356 = vmatprep.subr.bf16.mxu0 0
      %2357 = vmatpush1.bf16.msra.mxu0 %v2310
      %2358 = vmatprep.subr.bf16.mxu0 0
      %2359 = vmatpush2.bf16.msra.mxu0 %v2325
      %2360 = vmatprep.subr.bf16.mxu0 0
      %2361 = vmatpush2.bf16.msra.mxu0 %v2324
      %2362 = vmatprep.subr.bf16.mxu0 0
      %2363 = vmatpush2.bf16.msra.mxu0 %v2323
      %2364 = vmatprep.subr.bf16.mxu0 0
      %2365 = vmatpush2.bf16.msra.mxu0 %v2322
      %2366 = vmatprep.subr.bf16.mxu0 0
      %2367 = vmatpush2.bf16.msra.mxu0 %v2321
      %2368 = vmatprep.subr.bf16.mxu0 0
      %2369 = vmatpush2.bf16.msra.mxu0 %v2320
      %2370 = vmatprep.subr.bf16.mxu0 0
      %2371 = vmatpush2.bf16.msra.mxu0 %v2319
      %2372 = vmatprep.subr.bf16.mxu0 0
      %2373 = vmatpush2.bf16.msra.mxu0 %v2318
      %2374 = vmatprep.mubr.bf16.mxu0 %v2204
      %2375 = vmatmul.mubr.bf16.gmra.mxu0 %v2203
      %v2376 = vpop.f32.mrf.mxu0
      %v2377 = vadd.f32 %v2244, %v2376
      %v2378 = vpop.f32.mrf.mxu0
      %v2379 = vpop.f32.mrf.mxu0
      %v2380 = vadd.f32 %v2244, %v2379
      %v2381 = vpop.f32.mrf.mxu0
      %2382 = vmatprep.mubr.bf16.mxu0 %v2206
      %2383 = vmatmul.mubr.bf16.gmra.mxu0 %v2205
      %v2384 = vpop.f32.mrf.mxu0
      %v2385 = vadd.f32 %v2244, %v2384
      %v2386 = vpop.f32.mrf.mxu0
      %v2387 = vpop.f32.mrf.mxu0
      %v2388 = vpop.f32.mrf.mxu0
      %2389 = vdwg.mxu0
      %v2390 = vadd.f32 %v1956, %v2377
      %v2391 = vadd.f32 %v1957, %v2380
      %v2392 = vadd.f32 %v1958, %v2385
      %2393 = vst [vmem:[%s704] sm:$0xff] %v2390
      %2394 = vst [vmem:[%s704 + $0x8] sm:$0xff] %v2391
      %2395 = vst [vmem:[%s704 + $0x10] sm:$0xff] %v2392
      %p2396 = scmp.lt.s32.totalorder %s30, 1
      %s2397 = scalar_select %p2396, %s30, 1
      %s2398 = smul.addr %s2397, 3
      %s2399 = smul.addr %s2398, 8
      %s2400 = scalar_lea.vmem %s15, %s2399
      // Predicated region
      $region85: #{font_classifier_forward.2} parent=79 // pred_check
        %p2401 = pneg %p436
      $region86: #{font_classifier_forward.2} parent=79 // pred_check_branch
        %2403 = sbr.rel (%p2401) target = $region88
      $region87: #{font_classifier_forward.2} parent=79 // pred_region
        _
      $region88: #{font_classifier_forward.2} parent=79 // pred_fallthru
        _
    $region80: #{font_classifier_forward.2} parent=5 // pred_fallthru
      _
    %p2404 = scmp.le.s32.totalorder 2, %s21
    // Predicated region
    $region89: #{font_classifier_forward.2} parent=5 // pred_check
      %p2405 = pneg %p2404
    $region90: #{font_classifier_forward.2} parent=5 // pred_check_branch
      %2407 = sbr.rel (%p2405) target = $region92
    $region91: #{font_classifier_forward.2} parent=5 // pred_region
      %s2408 = ssub.s32 %s21, 2
      // Predicated region
      $region93: #{font_classifier_forward.2} parent=91 // pred_check
        %p2409 = pneg %p442
      $region94: #{font_classifier_forward.2} parent=91 // pred_check_branch
        %2411 = sbr.rel (%p2409) target = $region96
      $region95: #{font_classifier_forward.2} parent=91 // pred_region
        %p2412 = scmp.lt.s32.totalorder %s32, 1
        %s2413 = scalar_select %p2412, %s32, 1
        %s2414 = smul.addr %s2413, 3
        %s2415 = smul.addr %s2414, 8
        %s2416 = scalar_lea.vmem %s15, %s2415
      $region96: #{font_classifier_forward.2} parent=91 // pred_fallthru
        _
    $region92: #{font_classifier_forward.2} parent=5 // pred_fallthru
      _
  $region6: #{font_classifier_forward.2} parent=0 // loop_footer
    %s25 = sadd.s32 1, %s21
  $region7: #{font_classifier_forward.2} parent=0 // loop_footer_branch
    %20 = sbr.rel target = $region3
  $region8: #{font_classifier_forward.2} parent=0 // loop_exit
    _

</llo_original>
